<compile_context>
chip_gen: v7x
topology: tpu7x:2x2x1
jax: 0.10.0
libtpu: 0.0.40
codegen_flags: <defaults>
</compile_context>

<pallas_src>
import functools

import numpy as np
import jax
import jax.numpy as jnp
from jax.experimental import pallas as pl
from jax.experimental.pallas import tpu as pltpu


_VMEM_LIMIT = 32 * 1024 * 1024  # explicit scoped-VMEM limit, safe on v5e/v6e/v7x


# --------------------------------------------------------------------------- kernels

def _adapt_kernel(tok_ref, wc0_ref, rt_ref, lab_ref, wlab_ref, wc_out_ref, *,
                  adapt_iter, lr, norm_s):
    """Fused inner loop: SGD on the linear classifier through the bilinear upsample.

    tok_s, the bilinear matrix and Wc stay resident in VMEM for all iterations;
    dW is accumulated against the same resident tokens (no re-streaming).
    """
    B, hw, C = tok_ref.shape

    rt = rt_ref[...]                                   # (hw, HW) bf16, resident
    lab = lab_ref[...]                                 # (B, HW)  f32, class-1 indicator
    wlab = wlab_ref[...]                               # (B, HW)  f32, per-pixel CE weight
    inv_z = 1.0 / jnp.sum(wlab)                        # PyTorch weighted-CE 'mean' denom

    # Iteration-invariant per-batch tensors (normalization folded in, hoisted).
    toks, onehots, wzs = [], [], []
    for b in range(B):                                 # static, small batch
        t = tok_ref[b].astype(jnp.float32)             # (hw, C)
        if norm_s:                                     # F.normalize(dim=1), eps=1e-12 (f32 math)
            t = t / jnp.maximum(jnp.sqrt(jnp.sum(t * t, axis=-1, keepdims=True)), 1e-12)
        toks.append(t.astype(jnp.bfloat16))            # bf16 MXU operand
        lab_b = lab[b:b + 1, :]                        # (1, HW)
        onehots.append(jnp.concatenate([1.0 - lab_b, lab_b], axis=0))   # (2, HW)
        wzs.append(wlab[b:b + 1, :] * inv_z)           # (1, HW)

    # adapt_iter is small & static -> full unroll (gives the scheduler full visibility).
    wc = wc0_ref[...]                                  # (2, C) f32 carry
    for _ in range(adapt_iter):
        wc_bf = wc.astype(jnp.bfloat16)
        dw = jnp.zeros((2, C), jnp.float32)
        for b in range(B):
            tb = toks[b]
            # low-res logits: classes on sublanes, tokens on lanes (lane-dense)
            ll = jnp.einsum('kc,nc->kn', wc_bf, tb,
                            preferred_element_type=jnp.float32)       # (2, hw)
            li = jnp.dot(ll.astype(jnp.bfloat16), rt,
                         preferred_element_type=jnp.float32)          # (2, HW) bilinear up
            # 2-class softmax, explicit rows (pure VPU/EUP, f32)
            l0, l1 = li[0:1, :], li[1:2, :]
            m = jnp.maximum(l0, l1)
            e0, e1 = jnp.exp(l0 - m), jnp.exp(l1 - m)
            inv = 1.0 / (e0 + e1)
            p = jnp.concatenate([e0 * inv, e1 * inv], axis=0)         # (2, HW)
            g = (p - onehots[b]) * wzs[b]                             # dL/dlogits (weighted CE)
            gl = jnp.einsum('kp,np->kn', g.astype(jnp.bfloat16), rt,
                            preferred_element_type=jnp.float32)       # (2, hw) adjoint of upsample
            dw = dw + jnp.dot(gl.astype(jnp.bfloat16), tb,
                              preferred_element_type=jnp.float32)     # (2, C)  dW epilogue
        wc = wc - lr * dw                                             # SGD step (f32)
        # TODO(synk): DecoderSimple bias gradient not modeled (bias-free head).

    wc_out_ref[...] = wc


def _att_refine_kernel(tok_ref, wc_ref, wq_ref, bq_ref, wk_ref, bk_ref,
                       wv_ref, bv_ref, wo_ref, bo_ref, ln_g_ref, ln_b_ref,
                       pred_ref, *, heads, norm_q):
    """Fused: MHSA + residual + LayerNorm + einsum('lc,kc->kl') per batch element."""
    L, C = tok_ref.shape[1], tok_ref.shape[2]
    D = C // heads
    scale = 1.0 / float(D) ** 0.5

    tok = tok_ref[0].astype(jnp.float32)                               # (L, C)
    if norm_q:                                                         # F.normalize(dim=1)
        tok = tok / jnp.maximum(jnp.sqrt(jnp.sum(tok * tok, axis=-1, keepdims=True)), 1e-12)
    x = jnp.concatenate([tok, wc_ref[...]], axis=0)                    # (T, C) f32, T = L + 2
    x_bf = x.astype(jnp.bfloat16)

    acc = jnp.zeros(x.shape, jnp.float32)
    for h in range(heads):
        # Per-head weights were pre-split on the host: no activation slicing at
        # h*D boundaries, no head-output concatenate (out-proj accumulated instead).
        qh = jnp.dot(x_bf, wq_ref[h], preferred_element_type=jnp.float32) + bq_ref[h]
        kh = jnp.dot(x_bf, wk_ref[h], preferred_element_type=jnp.float32) + bk_ref[h]
        vh = jnp.dot(x_bf, wv_ref[h], preferred_element_type=jnp.float32) + bv_ref[h]
        s = jnp.einsum('td,sd->ts', qh.astype(jnp.bfloat16), kh.astype(jnp.bfloat16),
                       preferred_element_type=jnp.float32) * scale
        p = jax.nn.softmax(s, axis=-1)                                 # f32
        # TODO(synk): attention dropout not modeled (eval semantics).
        oh = jnp.dot(p.astype(jnp.bfloat16), vh.astype(jnp.bfloat16),
                     preferred_element_type=jnp.float32)               # (T, D)
        acc = acc + jnp.dot(oh.astype(jnp.bfloat16), wo_ref[h],
                            preferred_element_type=jnp.float32)        # head slice of out-proj

    y = x + acc + bo_ref[...]                                          # residual + proj bias
    mu = jnp.mean(y, axis=-1, keepdims=True)                           # LayerNorm, f32
    var = jnp.mean((y - mu) ** 2, axis=-1, keepdims=True)
    y = (y - mu) * jax.lax.rsqrt(var + 1e-5) * ln_g_ref[...] + ln_b_ref[...]

    tok_y, cls_y = y[:L, :], y[L:, :]
    # lane-dense output (classes on sublanes, query tokens on lanes) == 'cnn' layout
    pred_ref[0] = jnp.einsum('kc,lc->kl', cls_y.astype(jnp.bfloat16),
                             tok_y.astype(jnp.bfloat16),
                             preferred_element_type=jnp.float32)


def _predict_loss_kernel(tok_ref, wc_ref, p1_ref, rt_ref, lab_ref, wlab_ref,
                         pred0_ref, pred1_ref, pred2_ref, acc_ref, *, norm_q):
    """Fused: query logits + bilinear upsample + ensemble + 3x weighted-CE accumulation."""
    b = pl.program_id(0)

    @pl.when(b == 0)
    def _init():
        acc_ref[...] = jnp.zeros_like(acc_ref)

    tok = tok_ref[0].astype(jnp.float32)                               # (hw, C)
    if norm_q:
        tok = tok / jnp.maximum(jnp.sqrt(jnp.sum(tok * tok, axis=-1, keepdims=True)), 1e-12)
    rt = rt_ref[...]                                                   # (hw, HW) bf16

    # prediction 0: adapted linear head + bilinear upsample (lane-dense (2, HW))
    ll0 = jnp.einsum('kc,nc->kn', wc_ref[...].astype(jnp.bfloat16),
                     tok.astype(jnp.bfloat16), preferred_element_type=jnp.float32)
    p0 = jnp.dot(ll0.astype(jnp.bfloat16), rt, preferred_element_type=jnp.float32)
    # prediction 1: transformer-refined logits, upsampled
    p1 = jnp.dot(p1_ref[0].astype(jnp.bfloat16), rt, preferred_element_type=jnp.float32)
    # prediction 2: ensemble
    p2 = p0 + p1
    pred0_ref[0] = p0
    pred1_ref[0] = p1
    pred2_ref[0] = p2

    lab = lab_ref[0]                                                   # (1, HW) class-1 indicator
    w = wlab_ref[0]                                                    # (1, HW) per-pixel CE weight

    def wce_num(logits):   # weighted-NLL numerator for this batch element -> (1, 1)
        l0, l1 = logits[0:1, :], logits[1:2, :]
        m = jnp.maximum(l0, l1)
        lse = m + jnp.log(jnp.exp(l0 - m) + jnp.exp(l1 - m))
        lt = l0 * (1.0 - lab) + l1 * lab
        return jnp.sum(w * (lse - lt)).reshape(1, 1)

    # accumulate [num0, num1, num2, weight-denominator] across the batch grid
    acc_ref[...] += jnp.concatenate(
        [wce_num(p0), wce_num(p1), wce_num(p2), jnp.sum(w).reshape(1, 1)], axis=0)


# --------------------------------------------------------------------------- JAX glue

def bilinear_matrix(n_in, n_out):
    # Bilinear resize matrix, half-pixel centers (align_corners=False).
    i = np.arange(n_out)
    src = np.clip((i + 0.5) * n_in / n_out - 0.5, 0.0, n_in - 1)
    lo = np.floor(src).astype(np.int64)
    hi = np.minimum(lo + 1, n_in - 1)
    frac = (src - lo).astype(np.float32)
    M = np.zeros((n_out, n_in), dtype=np.float32)
    np.add.at(M, (np.arange(n_out), lo), 1.0 - frac)
    np.add.at(M, (np.arange(n_out), hi), frac)
    return M


def compute_weight(label, n_cls=2):
    flat = label.reshape(-1)
    counts = jnp.stack([jnp.sum(flat == i).astype(jnp.float32) for i in range(n_cls)])
    safe = jnp.where(counts > 0, counts, 1.0)
    w = counts[0] / safe
    return jnp.where(jnp.all(counts > 0), w, jnp.ones((n_cls,), jnp.float32))


def init_params(key, C):
    ks = jax.random.split(key, 5)
    std = 0.02
    return {
        "w_qkv": jax.random.normal(ks[0], (C, 3 * C), jnp.float32) * std,
        "b_qkv": jax.random.normal(ks[1], (3 * C,), jnp.float32) * std,
        "w_o": jax.random.normal(ks[2], (C, C), jnp.float32) * std,
        "b_o": jax.random.normal(ks[3], (C,), jnp.float32) * std,
        "ln_g": jnp.ones((C,), jnp.float32),
        "ln_b": jnp.zeros((C,), jnp.float32),
        # deterministic stand-in for classifier.reset_parameters()
        "w_cls": jax.random.normal(ks[4], (2, C), jnp.float32) * std,
    }


def _split_attention_params(params, heads):
    # Pre-split QKV / out-proj per head on the host (bf16 MXU operands), so the
    # kernel never slices activations at h*D boundaries nor concatenates heads.
    C = params["w_o"].shape[0]
    D = C // heads
    w_qkv, b_qkv = params["w_qkv"], params["b_qkv"]

    def split_w(w):     # (C, C) -> (heads, C, D); head h holds output cols h*D:(h+1)*D
        return jnp.transpose(w.reshape(C, heads, D), (1, 0, 2)).astype(jnp.bfloat16)

    def split_b(v):     # (C,) -> (heads, 1, D)
        return v.reshape(heads, 1, D).astype(jnp.float32)

    wq, wk, wv = (split_w(w_qkv[:, i * C:(i + 1) * C]) for i in range(3))
    bq, bk, bv = (split_b(b_qkv[i * C:(i + 1) * C]) for i in range(3))
    wo = params["w_o"].reshape(heads, D, C).astype(jnp.bfloat16)   # head h holds rows h*D:(h+1)*D
    bo = params["b_o"].reshape(1, C).astype(jnp.float32)
    ln_g = params["ln_g"].reshape(1, C).astype(jnp.float32)
    ln_b = params["ln_b"].reshape(1, C).astype(jnp.float32)
    return wq, bq, wk, bk, wv, bv, wo, bo, ln_g, ln_b


def sample_model_forward(f_s, f_q, label_s, label_q, params, args):
    B, C, hf, wf = f_q.shape
    H = W = args["image_size"]
    hw, HW = hf * wf, H * W
    heads = args["heads"]
    D = C // heads

    # Combined bilinear-upsample matrix (transposed): (hw, HW), bf16 for the MXU.
    rt = jnp.asarray(np.kron(bilinear_matrix(hf, H), bilinear_matrix(wf, W)).T,
                     dtype=jnp.bfloat16)

    weight_s = compute_weight(label_s, 2)
    weight_q = compute_weight(label_q, 2)

    lab_s = label_s.reshape(B, HW).astype(jnp.float32)
    lab_q = label_q.reshape(B, 1, HW).astype(jnp.float32)
    wlab_s = weight_s[0] * (1.0 - lab_s) + weight_s[1] * lab_s         # (B, HW)
    wlab_q = weight_q[0] * (1.0 - lab_q) + weight_q[1] * lab_q         # (B, 1, HW)

    # Token-major features (channels on lanes), bf16 HBM stream; the l2
    # normalization (F.normalize, f32 math) is folded into each consuming kernel.
    tok_s = jnp.transpose(f_s, (0, 2, 3, 1)).reshape(B, hw, C).astype(jnp.bfloat16)
    tok_q = jnp.transpose(f_q, (0, 2, 3, 1)).reshape(B, hw, C).astype(jnp.bfloat16)

    # -------- fused inner loop (analytic weighted-CE grad through head + upsample) --------
    wc = pl.pallas_call(
        functools.partial(_adapt_kernel, adapt_iter=args["adapt_iter"],
                          lr=args["lr_cls"], norm_s=args["norm_s"]),
        out_shape=jax.ShapeDtypeStruct((2, C), jnp.float32),
        compiler_params=pltpu.CompilerParams(vmem_limit_bytes=_VMEM_LIMIT),
    )(tok_s, params["w_cls"].astype(jnp.float32), rt, lab_s, wlab_s)

    # -------- transformer refinement of [query tokens ; adapted classifier weights] --------
    wq, bq, wk, bk, wv, bv, wo, bo, ln_g, ln_b = _split_attention_params(params, heads)
    pred1_low = pl.pallas_call(
        functools.partial(_att_refine_kernel, heads=heads, norm_q=args["norm_q"]),
        out_shape=jax.ShapeDtypeStruct((B, 2, hw), jnp.float32),
        grid=(B,),
        in_specs=[
            pl.BlockSpec((1, hw, C), lambda b: (b, 0, 0)),      # tok_q
            pl.BlockSpec((2, C), lambda b: (0, 0)),             # adapted classifier weights
            pl.BlockSpec((heads, C, D), lambda b: (0, 0, 0)),   # wq (per-head)
            pl.BlockSpec((heads, 1, D), lambda b: (0, 0, 0)),   # bq
            pl.BlockSpec((heads, C, D), lambda b: (0, 0, 0)),   # wk
            pl.BlockSpec((heads, 1, D), lambda b: (0, 0, 0)),   # bk
            pl.BlockSpec((heads, C, D), lambda b: (0, 0, 0)),   # wv
            pl.BlockSpec((heads, 1, D), lambda b: (0, 0, 0)),   # bv
            pl.BlockSpec((heads, D, C), lambda b: (0, 0, 0)),   # wo (per-head rows)
            pl.BlockSpec((1, C), lambda b: (0, 0)),             # bo
            pl.BlockSpec((1, C), lambda b: (0, 0)),             # LN gamma
            pl.BlockSpec((1, C), lambda b: (0, 0)),             # LN beta
        ],
        out_specs=pl.BlockSpec((1, 2, hw), lambda b: (b, 0, 0)),
        compiler_params=pltpu.CompilerParams(
            dimension_semantics=("parallel",), vmem_limit_bytes=_VMEM_LIMIT),
    )(tok_q, wc, wq, bq, wk, bk, wv, bv, wo, bo, ln_g, ln_b)

    # -------- fused query predictions + upsample + ensemble + 3x weighted CE --------
    p0, p1, p2, acc = pl.pallas_call(
        functools.partial(_predict_loss_kernel, norm_q=args["norm_q"]),
        out_shape=(
            jax.ShapeDtypeStruct((B, 2, HW), jnp.float32),
            jax.ShapeDtypeStruct((B, 2, HW), jnp.float32),
            jax.ShapeDtypeStruct((B, 2, HW), jnp.float32),
            jax.ShapeDtypeStruct((4, 1), jnp.float32),
        ),
        grid=(B,),
        in_specs=[
            pl.BlockSpec((1, hw, C), lambda b: (b, 0, 0)),      # tok_q
            pl.BlockSpec((2, C), lambda b: (0, 0)),             # adapted classifier weights
            pl.BlockSpec((1, 2, hw), lambda b: (b, 0, 0)),      # pred1 low-res
            pl.BlockSpec((hw, HW), lambda b: (0, 0)),           # bilinear matrix
            pl.BlockSpec((1, 1, HW), lambda b: (b, 0, 0)),      # labels
            pl.BlockSpec((1, 1, HW), lambda b: (b, 0, 0)),      # per-pixel CE weights
        ],
        out_specs=(
            pl.BlockSpec((1, 2, HW), lambda b: (b, 0, 0)),
            pl.BlockSpec((1, 2, HW), lambda b: (b, 0, 0)),
            pl.BlockSpec((1, 2, HW), lambda b: (b, 0, 0)),
            pl.BlockSpec((4, 1), lambda b: (0, 0)),             # resident CE accumulators
        ),
        compiler_params=pltpu.CompilerParams(
            dimension_semantics=("arbitrary",), vmem_limit_bytes=_VMEM_LIMIT),
    )(tok_q, wc, pred1_low, rt, lab_q, wlab_q)

    pred_q = [p0.reshape(B, 2, H, W), p1.reshape(B, 2, H, W), p2.reshape(B, 2, H, W)]
    den = acc[3, 0]
    loss_q = [acc[0, 0] / den, acc[1, 0] / den, acc[2, 0] / den]
    return pred_q, loss_q


# --------------------------------------------------------------------------- demo

if __name__ == "__main__":
    args = dict(image_size=16, encoder_dim=32, heads=2, norm_s=True, norm_q=True,
                adapt_iter=3, lr_cls=0.1)
    B, C, hf, wf, H = 2, args["encoder_dim"], 4, 4, args["image_size"]

    key = jax.random.PRNGKey(0)
    k1, k2, k3, k4, k5 = jax.random.split(key, 5)
    f_s = jax.random.normal(k1, (B, C, hf, wf), jnp.float32)   # support features (backbone output)
    f_q = jax.random.normal(k2, (B, C, hf, wf), jnp.float32)   # query features (backbone output)
    label_s = (jax.random.uniform(k3, (B, H, H)) > 0.5).astype(jnp.int32)
    label_q = (jax.random.uniform(k4, (B, H, H)) > 0.5).astype(jnp.int32)
    params = init_params(k5, C)

    pred_q, loss_q = sample_model_forward(f_s, f_q, label_s, label_q, params, args)
    jax.block_until_ready(loss_q[-1])

    assert len(pred_q) == 3 and len(loss_q) == 3
    assert pred_q[0].shape == (B, 2, H, H)
    assert all(bool(jnp.isfinite(l)) for l in loss_q)
    print("KERNEL_OK")
</pallas_src>

<mosaic_0001>
module attributes {stable_mosaic.version = 11 : i64} {
  func.func @_adapt_kernel(%arg0: memref<2x16x32xbf16, #tpu.memory_space<vmem>>, %arg1: memref<2x32xf32, #tpu.memory_space<vmem>>, %arg2: memref<16x256xbf16, #tpu.memory_space<vmem>>, %arg3: memref<2x256xf32, #tpu.memory_space<vmem>>, %arg4: memref<2x256xf32, #tpu.memory_space<vmem>>, %arg5: memref<2x32xf32, #tpu.memory_space<vmem>>) attributes {dimension_semantics = [], scalar_prefetch = 0 : i64, scratch_operands = 0 : i64, tpu.core_type = #tpu.core_type<tc>} {
    %c0 = arith.constant 0 : index
    %c0_0 = arith.constant 0 : index
    %0 = vector.load %arg2[%c0, %c0_0] : memref<16x256xbf16, #tpu.memory_space<vmem>>, vector<16x256xbf16>
    %c0_1 = arith.constant 0 : index
    %c0_2 = arith.constant 0 : index
    %1 = vector.load %arg3[%c0_1, %c0_2] : memref<2x256xf32, #tpu.memory_space<vmem>>, vector<2x256xf32>
    %c0_3 = arith.constant 0 : index
    %c0_4 = arith.constant 0 : index
    %2 = vector.load %arg4[%c0_3, %c0_4] : memref<2x256xf32, #tpu.memory_space<vmem>>, vector<2x256xf32>
    %3 = vector.shape_cast %2 : vector<2x256xf32> to vector<1x2x256xf32>
    %cst = arith.constant dense<0.000000e+00> : vector<1xf32>
    %4 = vector.multi_reduction <add>, %3, %cst [1, 2] : vector<1x2x256xf32> to vector<1xf32>
    %5 = vector.shape_cast %4 : vector<1xf32> to vector<1x1x1xf32>
    %6 = vector.extract %5[0, 0, 0] : f32 from vector<1x1x1xf32>
    %cst_5 = arith.constant 1.000000e+00 : f32
    %7 = arith.divf %cst_5, %6 : f32
    %c0_6 = arith.constant 0 : index
    %c0_7 = arith.constant 0 : index
    %c0_8 = arith.constant 0 : index
    %8 = vector.load %arg0[%c0_6, %c0_7, %c0_8] : memref<2x16x32xbf16, #tpu.memory_space<vmem>>, vector<1x16x32xbf16>
    %9 = vector.shape_cast %8 : vector<1x16x32xbf16> to vector<16x32xbf16>
    %10 = arith.extf %9 : vector<16x32xbf16> to vector<16x32xf32>
    %11 = arith.mulf %10, %10 : vector<16x32xf32>
    %cst_9 = arith.constant dense<0.000000e+00> : vector<16xf32>
    %12 = vector.multi_reduction <add>, %11, %cst_9 [1] : vector<16x32xf32> to vector<16xf32>
    %13 = vector.shape_cast %12 : vector<16xf32> to vector<16x1xf32>
    %14 = math.sqrt %13 : vector<16x1xf32>
    %cst_10 = arith.constant 9.99999996E-13 : f32
    %15 = vector.broadcast %cst_10 : f32 to vector<16x1xf32>
    %16 = arith.maximumf %14, %15 : vector<16x1xf32>
    %17 = vector.broadcast %16 : vector<16x1xf32> to vector<16x32xf32>
    %18 = arith.divf %10, %17 : vector<16x32xf32>
    %19 = arith.truncf %18 : vector<16x32xf32> to vector<16x32xbf16>
    %20 = vector.extract_strided_slice %1 {offsets = [0, 0], sizes = [1, 256], strides = [1, 1]} : vector<2x256xf32> to vector<1x256xf32>
    %cst_11 = arith.constant 1.000000e+00 : f32
    %21 = vector.broadcast %cst_11 : f32 to vector<1x256xf32>
    %22 = arith.subf %21, %20 : vector<1x256xf32>
    %23 = tpu.concatenate %22, %20 in 0 : vector<1x256xf32>, vector<1x256xf32> -> vector<2x256xf32>
    %24 = vector.extract_strided_slice %2 {offsets = [0, 0], sizes = [1, 256], strides = [1, 1]} : vector<2x256xf32> to vector<1x256xf32>
    %25 = vector.broadcast %7 : f32 to vector<1x256xf32>
    %26 = arith.mulf %24, %25 : vector<1x256xf32>
    %c1 = arith.constant 1 : index
    %c0_12 = arith.constant 0 : index
    %c0_13 = arith.constant 0 : index
    %27 = vector.load %arg0[%c1, %c0_12, %c0_13] : memref<2x16x32xbf16, #tpu.memory_space<vmem>>, vector<1x16x32xbf16>
    %28 = vector.shape_cast %27 : vector<1x16x32xbf16> to vector<16x32xbf16>
    %29 = arith.extf %28 : vector<16x32xbf16> to vector<16x32xf32>
    %30 = arith.mulf %29, %29 : vector<16x32xf32>
    %cst_14 = arith.constant dense<0.000000e+00> : vector<16xf32>
    %31 = vector.multi_reduction <add>, %30, %cst_14 [1] : vector<16x32xf32> to vector<16xf32>
    %32 = vector.shape_cast %31 : vector<16xf32> to vector<16x1xf32>
    %33 = math.sqrt %32 : vector<16x1xf32>
    %cst_15 = arith.constant 9.99999996E-13 : f32
    %34 = vector.broadcast %cst_15 : f32 to vector<16x1xf32>
    %35 = arith.maximumf %33, %34 : vector<16x1xf32>
    %36 = vector.broadcast %35 : vector<16x1xf32> to vector<16x32xf32>
    %37 = arith.divf %29, %36 : vector<16x32xf32>
    %38 = arith.truncf %37 : vector<16x32xf32> to vector<16x32xbf16>
    %39 = vector.extract_strided_slice %1 {offsets = [1, 0], sizes = [1, 256], strides = [1, 1]} : vector<2x256xf32> to vector<1x256xf32>
    %cst_16 = arith.constant 1.000000e+00 : f32
    %40 = vector.broadcast %cst_16 : f32 to vector<1x256xf32>
    %41 = arith.subf %40, %39 : vector<1x256xf32>
    %42 = tpu.concatenate %41, %39 in 0 : vector<1x256xf32>, vector<1x256xf32> -> vector<2x256xf32>
    %43 = vector.extract_strided_slice %2 {offsets = [1, 0], sizes = [1, 256], strides = [1, 1]} : vector<2x256xf32> to vector<1x256xf32>
    %44 = vector.broadcast %7 : f32 to vector<1x256xf32>
    %45 = arith.mulf %43, %44 : vector<1x256xf32>
    %c0_17 = arith.constant 0 : index
    %c0_18 = arith.constant 0 : index
    %46 = vector.load %arg1[%c0_17, %c0_18] : memref<2x32xf32, #tpu.memory_space<vmem>>, vector<2x32xf32>
    %47 = arith.truncf %46 : vector<2x32xf32> to vector<2x32xbf16>
    %cst_19 = arith.constant 0.000000e+00 : f32
    %48 = vector.broadcast %cst_19 : f32 to vector<2x32xf32>
    "tpu.trace_start"() <{level = 10 : i32, message = "kc,nc->kn"}> : () -> ()
    %cst_20 = arith.constant dense<0.000000e+00> : vector<2x16xf32>
    %49 = tpu.matmul %47, %19, %cst_20 {dimension_numbers = #tpu.dot_dimension_numbers<[1], [1], [0], [0], [0, 0, 1, 0], [], []>} : vector<2x32xbf16>, vector<16x32xbf16>, vector<2x16xf32> -> vector<2x16xf32>
    "tpu.trace_stop"() : () -> ()
    %50 = arith.truncf %49 : vector<2x16xf32> to vector<2x16xbf16>
    %cst_21 = arith.constant dense<0.000000e+00> : vector<2x256xf32>
    %51 = tpu.matmul %50, %0, %cst_21 {dimension_numbers = #tpu.dot_dimension_numbers<[1], [0], [0], [1], [0, 0, 1, 1], [], []>} : vector<2x16xbf16>, vector<16x256xbf16>, vector<2x256xf32> -> vector<2x256xf32>
    %52 = vector.extract_strided_slice %51 {offsets = [0, 0], sizes = [1, 256], strides = [1, 1]} : vector<2x256xf32> to vector<1x256xf32>
    %53 = vector.extract_strided_slice %51 {offsets = [1, 0], sizes = [1, 256], strides = [1, 1]} : vector<2x256xf32> to vector<1x256xf32>
    %54 = arith.maximumf %52, %53 : vector<1x256xf32>
    %55 = arith.subf %52, %54 : vector<1x256xf32>
    %56 = math.exp %55 : vector<1x256xf32>
    %57 = arith.subf %53, %54 : vector<1x256xf32>
    %58 = math.exp %57 : vector<1x256xf32>
    %59 = arith.addf %56, %58 : vector<1x256xf32>
    %cst_22 = arith.constant 1.000000e+00 : f32
    %60 = vector.broadcast %cst_22 : f32 to vector<1x256xf32>
    %61 = arith.divf %60, %59 : vector<1x256xf32>
    %62 = arith.mulf %56, %61 : vector<1x256xf32>
    %63 = arith.mulf %58, %61 : vector<1x256xf32>
    %64 = tpu.concatenate %62, %63 in 0 : vector<1x256xf32>, vector<1x256xf32> -> vector<2x256xf32>
    %65 = arith.subf %64, %23 : vector<2x256xf32>
    %66 = vector.broadcast %26 : vector<1x256xf32> to vector<2x256xf32>
    %67 = arith.mulf %65, %66 : vector<2x256xf32>
    %68 = arith.truncf %67 : vector<2x256xf32> to vector<2x256xbf16>
    "tpu.trace_start"() <{level = 10 : i32, message = "kp,np->kn"}> : () -> ()
    %cst_23 = arith.constant dense<0.000000e+00> : vector<2x16xf32>
    %69 = tpu.matmul %68, %0, %cst_23 {dimension_numbers = #tpu.dot_dimension_numbers<[1], [1], [0], [0], [0, 0, 1, 0], [], []>} : vector<2x256xbf16>, vector<16x256xbf16>, vector<2x16xf32> -> vector<2x16xf32>
    "tpu.trace_stop"() : () -> ()
    %70 = arith.truncf %69 : vector<2x16xf32> to vector<2x16xbf16>
    %cst_24 = arith.constant dense<0.000000e+00> : vector<2x32xf32>
    %71 = tpu.matmul %70, %19, %cst_24 {dimension_numbers = #tpu.dot_dimension_numbers<[1], [0], [0], [1], [0, 0, 1, 1], [], []>} : vector<2x16xbf16>, vector<16x32xbf16>, vector<2x32xf32> -> vector<2x32xf32>
    %72 = arith.addf %48, %71 : vector<2x32xf32>
    "tpu.trace_start"() <{level = 10 : i32, message = "kc,nc->kn"}> : () -> ()
    %cst_25 = arith.constant dense<0.000000e+00> : vector<2x16xf32>
    %73 = tpu.matmul %47, %38, %cst_25 {dimension_numbers = #tpu.dot_dimension_numbers<[1], [1], [0], [0], [0, 0, 1, 0], [], []>} : vector<2x32xbf16>, vector<16x32xbf16>, vector<2x16xf32> -> vector<2x16xf32>
    "tpu.trace_stop"() : () -> ()
    %74 = arith.truncf %73 : vector<2x16xf32> to vector<2x16xbf16>
    %cst_26 = arith.constant dense<0.000000e+00> : vector<2x256xf32>
    %75 = tpu.matmul %74, %0, %cst_26 {dimension_numbers = #tpu.dot_dimension_numbers<[1], [0], [0], [1], [0, 0, 1, 1], [], []>} : vector<2x16xbf16>, vector<16x256xbf16>, vector<2x256xf32> -> vector<2x256xf32>
    %76 = vector.extract_strided_slice %75 {offsets = [0, 0], sizes = [1, 256], strides = [1, 1]} : vector<2x256xf32> to vector<1x256xf32>
    %77 = vector.extract_strided_slice %75 {offsets = [1, 0], sizes = [1, 256], strides = [1, 1]} : vector<2x256xf32> to vector<1x256xf32>
    %78 = arith.maximumf %76, %77 : vector<1x256xf32>
    %79 = arith.subf %76, %78 : vector<1x256xf32>
    %80 = math.exp %79 : vector<1x256xf32>
    %81 = arith.subf %77, %78 : vector<1x256xf32>
    %82 = math.exp %81 : vector<1x256xf32>
    %83 = arith.addf %80, %82 : vector<1x256xf32>
    %cst_27 = arith.constant 1.000000e+00 : f32
    %84 = vector.broadcast %cst_27 : f32 to vector<1x256xf32>
    %85 = arith.divf %84, %83 : vector<1x256xf32>
    %86 = arith.mulf %80, %85 : vector<1x256xf32>
    %87 = arith.mulf %82, %85 : vector<1x256xf32>
    %88 = tpu.concatenate %86, %87 in 0 : vector<1x256xf32>, vector<1x256xf32> -> vector<2x256xf32>
    %89 = arith.subf %88, %42 : vector<2x256xf32>
    %90 = vector.broadcast %45 : vector<1x256xf32> to vector<2x256xf32>
    %91 = arith.mulf %89, %90 : vector<2x256xf32>
    %92 = arith.truncf %91 : vector<2x256xf32> to vector<2x256xbf16>
    "tpu.trace_start"() <{level = 10 : i32, message = "kp,np->kn"}> : () -> ()
    %cst_28 = arith.constant dense<0.000000e+00> : vector<2x16xf32>
    %93 = tpu.matmul %92, %0, %cst_28 {dimension_numbers = #tpu.dot_dimension_numbers<[1], [1], [0], [0], [0, 0, 1, 0], [], []>} : vector<2x256xbf16>, vector<16x256xbf16>, vector<2x16xf32> -> vector<2x16xf32>
    "tpu.trace_stop"() : () -> ()
    %94 = arith.truncf %93 : vector<2x16xf32> to vector<2x16xbf16>
    %cst_29 = arith.constant dense<0.000000e+00> : vector<2x32xf32>
    %95 = tpu.matmul %94, %38, %cst_29 {dimension_numbers = #tpu.dot_dimension_numbers<[1], [0], [0], [1], [0, 0, 1, 1], [], []>} : vector<2x16xbf16>, vector<16x32xbf16>, vector<2x32xf32> -> vector<2x32xf32>
    %96 = arith.addf %72, %95 : vector<2x32xf32>
    %cst_30 = arith.constant 1.000000e-01 : f32
    %97 = vector.broadcast %cst_30 : f32 to vector<2x32xf32>
    %98 = arith.mulf %97, %96 : vector<2x32xf32>
    %99 = arith.subf %46, %98 : vector<2x32xf32>
    %100 = arith.truncf %99 : vector<2x32xf32> to vector<2x32xbf16>
    %cst_31 = arith.constant 0.000000e+00 : f32
    %101 = vector.broadcast %cst_31 : f32 to vector<2x32xf32>
    "tpu.trace_start"() <{level = 10 : i32, message = "kc,nc->kn"}> : () -> ()
    %cst_32 = arith.constant dense<0.000000e+00> : vector<2x16xf32>
    %102 = tpu.matmul %100, %19, %cst_32 {dimension_numbers = #tpu.dot_dimension_numbers<[1], [1], [0], [0], [0, 0, 1, 0], [], []>} : vector<2x32xbf16>, vector<16x32xbf16>, vector<2x16xf32> -> vector<2x16xf32>
    "tpu.trace_stop"() : () -> ()
    %103 = arith.truncf %102 : vector<2x16xf32> to vector<2x16xbf16>
    %cst_33 = arith.constant dense<0.000000e+00> : vector<2x256xf32>
    %104 = tpu.matmul %103, %0, %cst_33 {dimension_numbers = #tpu.dot_dimension_numbers<[1], [0], [0], [1], [0, 0, 1, 1], [], []>} : vector<2x16xbf16>, vector<16x256xbf16>, vector<2x256xf32> -> vector<2x256xf32>
    %105 = vector.extract_strided_slice %104 {offsets = [0, 0], sizes = [1, 256], strides = [1, 1]} : vector<2x256xf32> to vector<1x256xf32>
    %106 = vector.extract_strided_slice %104 {offsets = [1, 0], sizes = [1, 256], strides = [1, 1]} : vector<2x256xf32> to vector<1x256xf32>
    %107 = arith.maximumf %105, %106 : vector<1x256xf32>
    %108 = arith.subf %105, %107 : vector<1x256xf32>
    %109 = math.exp %108 : vector<1x256xf32>
    %110 = arith.subf %106, %107 : vector<1x256xf32>
    %111 = math.exp %110 : vector<1x256xf32>
    %112 = arith.addf %109, %111 : vector<1x256xf32>
    %cst_34 = arith.constant 1.000000e+00 : f32
    %113 = vector.broadcast %cst_34 : f32 to vector<1x256xf32>
    %114 = arith.divf %113, %112 : vector<1x256xf32>
    %115 = arith.mulf %109, %114 : vector<1x256xf32>
    %116 = arith.mulf %111, %114 : vector<1x256xf32>
    %117 = tpu.concatenate %115, %116 in 0 : vector<1x256xf32>, vector<1x256xf32> -> vector<2x256xf32>
    %118 = arith.subf %117, %23 : vector<2x256xf32>
    %119 = vector.broadcast %26 : vector<1x256xf32> to vector<2x256xf32>
    %120 = arith.mulf %118, %119 : vector<2x256xf32>
    %121 = arith.truncf %120 : vector<2x256xf32> to vector<2x256xbf16>
    "tpu.trace_start"() <{level = 10 : i32, message = "kp,np->kn"}> : () -> ()
    %cst_35 = arith.constant dense<0.000000e+00> : vector<2x16xf32>
    %122 = tpu.matmul %121, %0, %cst_35 {dimension_numbers = #tpu.dot_dimension_numbers<[1], [1], [0], [0], [0, 0, 1, 0], [], []>} : vector<2x256xbf16>, vector<16x256xbf16>, vector<2x16xf32> -> vector<2x16xf32>
    "tpu.trace_stop"() : () -> ()
    %123 = arith.truncf %122 : vector<2x16xf32> to vector<2x16xbf16>
    %cst_36 = arith.constant dense<0.000000e+00> : vector<2x32xf32>
    %124 = tpu.matmul %123, %19, %cst_36 {dimension_numbers = #tpu.dot_dimension_numbers<[1], [0], [0], [1], [0, 0, 1, 1], [], []>} : vector<2x16xbf16>, vector<16x32xbf16>, vector<2x32xf32> -> vector<2x32xf32>
    %125 = arith.addf %101, %124 : vector<2x32xf32>
    "tpu.trace_start"() <{level = 10 : i32, message = "kc,nc->kn"}> : () -> ()
    %cst_37 = arith.constant dense<0.000000e+00> : vector<2x16xf32>
    %126 = tpu.matmul %100, %38, %cst_37 {dimension_numbers = #tpu.dot_dimension_numbers<[1], [1], [0], [0], [0, 0, 1, 0], [], []>} : vector<2x32xbf16>, vector<16x32xbf16>, vector<2x16xf32> -> vector<2x16xf32>
    "tpu.trace_stop"() : () -> ()
    %127 = arith.truncf %126 : vector<2x16xf32> to vector<2x16xbf16>
    %cst_38 = arith.constant dense<0.000000e+00> : vector<2x256xf32>
    %128 = tpu.matmul %127, %0, %cst_38 {dimension_numbers = #tpu.dot_dimension_numbers<[1], [0], [0], [1], [0, 0, 1, 1], [], []>} : vector<2x16xbf16>, vector<16x256xbf16>, vector<2x256xf32> -> vector<2x256xf32>
    %129 = vector.extract_strided_slice %128 {offsets = [0, 0], sizes = [1, 256], strides = [1, 1]} : vector<2x256xf32> to vector<1x256xf32>
    %130 = vector.extract_strided_slice %128 {offsets = [1, 0], sizes = [1, 256], strides = [1, 1]} : vector<2x256xf32> to vector<1x256xf32>
    %131 = arith.maximumf %129, %130 : vector<1x256xf32>
    %132 = arith.subf %129, %131 : vector<1x256xf32>
    %133 = math.exp %132 : vector<1x256xf32>
    %134 = arith.subf %130, %131 : vector<1x256xf32>
    %135 = math.exp %134 : vector<1x256xf32>
    %136 = arith.addf %133, %135 : vector<1x256xf32>
    %cst_39 = arith.constant 1.000000e+00 : f32
    %137 = vector.broadcast %cst_39 : f32 to vector<1x256xf32>
    %138 = arith.divf %137, %136 : vector<1x256xf32>
    %139 = arith.mulf %133, %138 : vector<1x256xf32>
    %140 = arith.mulf %135, %138 : vector<1x256xf32>
    %141 = tpu.concatenate %139, %140 in 0 : vector<1x256xf32>, vector<1x256xf32> -> vector<2x256xf32>
    %142 = arith.subf %141, %42 : vector<2x256xf32>
    %143 = vector.broadcast %45 : vector<1x256xf32> to vector<2x256xf32>
    %144 = arith.mulf %142, %143 : vector<2x256xf32>
    %145 = arith.truncf %144 : vector<2x256xf32> to vector<2x256xbf16>
    "tpu.trace_start"() <{level = 10 : i32, message = "kp,np->kn"}> : () -> ()
    %cst_40 = arith.constant dense<0.000000e+00> : vector<2x16xf32>
    %146 = tpu.matmul %145, %0, %cst_40 {dimension_numbers = #tpu.dot_dimension_numbers<[1], [1], [0], [0], [0, 0, 1, 0], [], []>} : vector<2x256xbf16>, vector<16x256xbf16>, vector<2x16xf32> -> vector<2x16xf32>
    "tpu.trace_stop"() : () -> ()
    %147 = arith.truncf %146 : vector<2x16xf32> to vector<2x16xbf16>
    %cst_41 = arith.constant dense<0.000000e+00> : vector<2x32xf32>
    %148 = tpu.matmul %147, %38, %cst_41 {dimension_numbers = #tpu.dot_dimension_numbers<[1], [0], [0], [1], [0, 0, 1, 1], [], []>} : vector<2x16xbf16>, vector<16x32xbf16>, vector<2x32xf32> -> vector<2x32xf32>
    %149 = arith.addf %125, %148 : vector<2x32xf32>
    %cst_42 = arith.constant 1.000000e-01 : f32
    %150 = vector.broadcast %cst_42 : f32 to vector<2x32xf32>
    %151 = arith.mulf %150, %149 : vector<2x32xf32>
    %152 = arith.subf %99, %151 : vector<2x32xf32>
    %153 = arith.truncf %152 : vector<2x32xf32> to vector<2x32xbf16>
    %cst_43 = arith.constant 0.000000e+00 : f32
    %154 = vector.broadcast %cst_43 : f32 to vector<2x32xf32>
    "tpu.trace_start"() <{level = 10 : i32, message = "kc,nc->kn"}> : () -> ()
    %cst_44 = arith.constant dense<0.000000e+00> : vector<2x16xf32>
    %155 = tpu.matmul %153, %19, %cst_44 {dimension_numbers = #tpu.dot_dimension_numbers<[1], [1], [0], [0], [0, 0, 1, 0], [], []>} : vector<2x32xbf16>, vector<16x32xbf16>, vector<2x16xf32> -> vector<2x16xf32>
    "tpu.trace_stop"() : () -> ()
    %156 = arith.truncf %155 : vector<2x16xf32> to vector<2x16xbf16>
    %cst_45 = arith.constant dense<0.000000e+00> : vector<2x256xf32>
    %157 = tpu.matmul %156, %0, %cst_45 {dimension_numbers = #tpu.dot_dimension_numbers<[1], [0], [0], [1], [0, 0, 1, 1], [], []>} : vector<2x16xbf16>, vector<16x256xbf16>, vector<2x256xf32> -> vector<2x256xf32>
    %158 = vector.extract_strided_slice %157 {offsets = [0, 0], sizes = [1, 256], strides = [1, 1]} : vector<2x256xf32> to vector<1x256xf32>
    %159 = vector.extract_strided_slice %157 {offsets = [1, 0], sizes = [1, 256], strides = [1, 1]} : vector<2x256xf32> to vector<1x256xf32>
    %160 = arith.maximumf %158, %159 : vector<1x256xf32>
    %161 = arith.subf %158, %160 : vector<1x256xf32>
    %162 = math.exp %161 : vector<1x256xf32>
    %163 = arith.subf %159, %160 : vector<1x256xf32>
    %164 = math.exp %163 : vector<1x256xf32>
    %165 = arith.addf %162, %164 : vector<1x256xf32>
    %cst_46 = arith.constant 1.000000e+00 : f32
    %166 = vector.broadcast %cst_46 : f32 to vector<1x256xf32>
    %167 = arith.divf %166, %165 : vector<1x256xf32>
    %168 = arith.mulf %162, %167 : vector<1x256xf32>
    %169 = arith.mulf %164, %167 : vector<1x256xf32>
    %170 = tpu.concatenate %168, %169 in 0 : vector<1x256xf32>, vector<1x256xf32> -> vector<2x256xf32>
    %171 = arith.subf %170, %23 : vector<2x256xf32>
    %172 = vector.broadcast %26 : vector<1x256xf32> to vector<2x256xf32>
    %173 = arith.mulf %171, %172 : vector<2x256xf32>
    %174 = arith.truncf %173 : vector<2x256xf32> to vector<2x256xbf16>
    "tpu.trace_start"() <{level = 10 : i32, message = "kp,np->kn"}> : () -> ()
    %cst_47 = arith.constant dense<0.000000e+00> : vector<2x16xf32>
    %175 = tpu.matmul %174, %0, %cst_47 {dimension_numbers = #tpu.dot_dimension_numbers<[1], [1], [0], [0], [0, 0, 1, 0], [], []>} : vector<2x256xbf16>, vector<16x256xbf16>, vector<2x16xf32> -> vector<2x16xf32>
    "tpu.trace_stop"() : () -> ()
    %176 = arith.truncf %175 : vector<2x16xf32> to vector<2x16xbf16>
    %cst_48 = arith.constant dense<0.000000e+00> : vector<2x32xf32>
    %177 = tpu.matmul %176, %19, %cst_48 {dimension_numbers = #tpu.dot_dimension_numbers<[1], [0], [0], [1], [0, 0, 1, 1], [], []>} : vector<2x16xbf16>, vector<16x32xbf16>, vector<2x32xf32> -> vector<2x32xf32>
    %178 = arith.addf %154, %177 : vector<2x32xf32>
    "tpu.trace_start"() <{level = 10 : i32, message = "kc,nc->kn"}> : () -> ()
    %cst_49 = arith.constant dense<0.000000e+00> : vector<2x16xf32>
    %179 = tpu.matmul %153, %38, %cst_49 {dimension_numbers = #tpu.dot_dimension_numbers<[1], [1], [0], [0], [0, 0, 1, 0], [], []>} : vector<2x32xbf16>, vector<16x32xbf16>, vector<2x16xf32> -> vector<2x16xf32>
    "tpu.trace_stop"() : () -> ()
    %180 = arith.truncf %179 : vector<2x16xf32> to vector<2x16xbf16>
    %cst_50 = arith.constant dense<0.000000e+00> : vector<2x256xf32>
    %181 = tpu.matmul %180, %0, %cst_50 {dimension_numbers = #tpu.dot_dimension_numbers<[1], [0], [0], [1], [0, 0, 1, 1], [], []>} : vector<2x16xbf16>, vector<16x256xbf16>, vector<2x256xf32> -> vector<2x256xf32>
    %182 = vector.extract_strided_slice %181 {offsets = [0, 0], sizes = [1, 256], strides = [1, 1]} : vector<2x256xf32> to vector<1x256xf32>
    %183 = vector.extract_strided_slice %181 {offsets = [1, 0], sizes = [1, 256], strides = [1, 1]} : vector<2x256xf32> to vector<1x256xf32>
    %184 = arith.maximumf %182, %183 : vector<1x256xf32>
    %185 = arith.subf %182, %184 : vector<1x256xf32>
    %186 = math.exp %185 : vector<1x256xf32>
    %187 = arith.subf %183, %184 : vector<1x256xf32>
    %188 = math.exp %187 : vector<1x256xf32>
    %189 = arith.addf %186, %188 : vector<1x256xf32>
    %cst_51 = arith.constant 1.000000e+00 : f32
    %190 = vector.broadcast %cst_51 : f32 to vector<1x256xf32>
    %191 = arith.divf %190, %189 : vector<1x256xf32>
    %192 = arith.mulf %186, %191 : vector<1x256xf32>
    %193 = arith.mulf %188, %191 : vector<1x256xf32>
    %194 = tpu.concatenate %192, %193 in 0 : vector<1x256xf32>, vector<1x256xf32> -> vector<2x256xf32>
    %195 = arith.subf %194, %42 : vector<2x256xf32>
    %196 = vector.broadcast %45 : vector<1x256xf32> to vector<2x256xf32>
    %197 = arith.mulf %195, %196 : vector<2x256xf32>
    %198 = arith.truncf %197 : vector<2x256xf32> to vector<2x256xbf16>
    "tpu.trace_start"() <{level = 10 : i32, message = "kp,np->kn"}> : () -> ()
    %cst_52 = arith.constant dense<0.000000e+00> : vector<2x16xf32>
    %199 = tpu.matmul %198, %0, %cst_52 {dimension_numbers = #tpu.dot_dimension_numbers<[1], [1], [0], [0], [0, 0, 1, 0], [], []>} : vector<2x256xbf16>, vector<16x256xbf16>, vector<2x16xf32> -> vector<2x16xf32>
    "tpu.trace_stop"() : () -> ()
    %200 = arith.truncf %199 : vector<2x16xf32> to vector<2x16xbf16>
    %cst_53 = arith.constant dense<0.000000e+00> : vector<2x32xf32>
    %201 = tpu.matmul %200, %38, %cst_53 {dimension_numbers = #tpu.dot_dimension_numbers<[1], [0], [0], [1], [0, 0, 1, 1], [], []>} : vector<2x16xbf16>, vector<16x32xbf16>, vector<2x32xf32> -> vector<2x32xf32>
    %202 = arith.addf %178, %201 : vector<2x32xf32>
    %cst_54 = arith.constant 1.000000e-01 : f32
    %203 = vector.broadcast %cst_54 : f32 to vector<2x32xf32>
    %204 = arith.mulf %203, %202 : vector<2x32xf32>
    %205 = arith.subf %152, %204 : vector<2x32xf32>
    %c0_55 = arith.constant 0 : index
    %c0_56 = arith.constant 0 : index
    %206 = vector.load %arg5[%c0_55, %c0_56] : memref<2x32xf32, #tpu.memory_space<vmem>>, vector<2x32xf32>
    tpu.vector_store %arg5[%c0_55, %c0_56], %205 {strides = array<i32>} : memref<2x32xf32, #tpu.memory_space<vmem>>, vector<2x32xf32>,
    return
  }
}

</mosaic_0001>

<llo_original>
// kernel: tpu_custom_call.1
$region0: #{tpu_custom_call.1}
  #allocation0 [shape = 'u32[]', space=smem, size = 0x4, offset = 0x4, fixed_abs, tag = 'smem constant byte address 0x4 - core index']
  #allocation1 [shape = 'u32[144,128]{1,0:T(1,128)}', space=vmem, size = 0x12000, scoped, tag = 'internal scratch']
  %s0 = inlined_call_operand.hbm [shape: bf16[2,16,32], index: 0, kind: input, shape index: {}]
  %s1 = inlined_call_operand.vmem [shape: f32[2,32], index: 1, kind: input, shape index: {}]
  %s2 = inlined_call_operand.hbm [shape: bf16[16,256], index: 2, kind: input, shape index: {}]
  %s3 = inlined_call_operand.vmem [shape: f32[2,256], index: 3, kind: input, shape index: {}]
  %s4 = inlined_call_operand.vmem [shape: f32[2,256], index: 4, kind: input, shape index: {}]
  %s5 = inlined_call_operand.hbm [shape: f32[2,32], index: 5, kind: output, shape index: {}]
  %s6 = sld [smem:[#allocation0]]
  $region38: #{tpu_custom_call.1} parent=0
    _
  %s8 = ssub.s32 1, %s6
  %s9 = scalar_select 0, %s8, %s6
  $region1: #{tpu_custom_call.1} parent=0
    #allocation2 [shape = 'u8[8192]{0}', space=vmem, size = 0x2000, scoped, tag = 'input window, operand 0, single buffered']
    #allocation3 [shape = 's32[1]{0}', space=sflag, size = 0x4, scoped, tag = 'scoped memory for tpu_custom_call.1']
    #allocation4 [shape = 's32[1]{0}', space=sflag, size = 0x4, scoped, tag = 'scoped memory for tpu_custom_call.1']
    #allocation5 [shape = 'u8[8192]{0}', space=vmem, size = 0x2000, scoped, tag = 'input window, operand 2, single buffered']
    #allocation6 [shape = 's32[1]{0}', space=sflag, size = 0x4, scoped, tag = 'scoped memory for tpu_custom_call.1']
    #allocation7 [shape = 'u8[1024]{0}', space=vmem, size = 0x400, scoped, tag = 'output window, operand 0, single buffered']
    %10 = vsyncpa [#allocation3], 0
    %11 = vsyncpa [#allocation6], 0
    %12 = vsyncpa [#allocation4], 0
    // Predicated region
    $region2: #{tpu_custom_call.1} parent=1 // pred_check
      _
    $region3: #{tpu_custom_call.1} parent=1 // pred_check_branch
      %14 = sbr.rel (0) target = $region5
    $region4: #{tpu_custom_call.1} parent=1 // pred_region
      %s16 = ssub.s32 256, 256
      %17 = vsyncadd [#allocation3], %s16
      %s18 = sshll.u32 [#allocation2], 4
      %s19 = int_to_ptr.vmem [resolvable:$true] %s18
      %24 = dma.hbm_to_vmem [thread:$0]  %s0, 256, %s19, [#allocation3], 64, 64, 4
    $region5: #{tpu_custom_call.1} parent=1 // pred_fallthru
      _
    // Predicated region
    $region6: #{tpu_custom_call.1} parent=1 // pred_check
      _
    $region7: #{tpu_custom_call.1} parent=1 // pred_check_branch
      %26 = sbr.rel (0) target = $region9
    $region8: #{tpu_custom_call.1} parent=1 // pred_region
      _
    $region9: #{tpu_custom_call.1} parent=1 // pred_fallthru
      _
    // Predicated region
    $region10: #{tpu_custom_call.1} parent=1 // pred_check
      _
    $region11: #{tpu_custom_call.1} parent=1 // pred_check_branch
      %28 = sbr.rel (0) target = $region13
    $region12: #{tpu_custom_call.1} parent=1 // pred_region
      %s30 = ssub.s32 256, 256
      %31 = vsyncadd [#allocation6], %s30
      %s32 = sshll.u32 [#allocation5], 4
      %s33 = int_to_ptr.vmem [resolvable:$true] %s32
      %38 = dma.hbm_to_vmem [thread:$0]  %s2, 256, %s33, [#allocation6], 128, 128, 8
    $region13: #{tpu_custom_call.1} parent=1 // pred_fallthru
      _
    // Predicated region
    $region14: #{tpu_custom_call.1} parent=1 // pred_check
      _
    $region15: #{tpu_custom_call.1} parent=1 // pred_check_branch
      %40 = sbr.rel (0) target = $region17
    $region16: #{tpu_custom_call.1} parent=1 // pred_region
      _
    $region17: #{tpu_custom_call.1} parent=1 // pred_fallthru
      _
    // Predicated region
    $region18: #{tpu_custom_call.1} parent=1 // pred_check
      _
    $region19: #{tpu_custom_call.1} parent=1 // pred_check_branch
      %42 = sbr.rel (0) target = $region21
    $region20: #{tpu_custom_call.1} parent=1 // pred_region
      _
    $region21: #{tpu_custom_call.1} parent=1 // pred_fallthru
      _
    // Predicated region
    $region22: #{tpu_custom_call.1} parent=1 // pred_check
      _
    $region23: #{tpu_custom_call.1} parent=1 // pred_check_branch
      %44 = sbr.rel (0) target = $region25
    $region24: #{tpu_custom_call.1} parent=1 // pred_region
      %45 = dma.done [#allocation3], 256
    $region25: #{tpu_custom_call.1} parent=1 // pred_fallthru
      _
    // Predicated region
    $region26: #{tpu_custom_call.1} parent=1 // pred_check
      _
    $region27: #{tpu_custom_call.1} parent=1 // pred_check_branch
      %47 = sbr.rel (0) target = $region29
    $region28: #{tpu_custom_call.1} parent=1 // pred_region
      %48 = dma.done [#allocation6], 256
    $region29: #{tpu_custom_call.1} parent=1 // pred_fallthru
      _
    %v50 = vld [vmem:[#allocation5] sm:$0xff]
    %v51 = vld [vmem:[#allocation5 + $0x8] sm:$0xff]
    %v52 = vld [vmem:[%s3] sm:$0xf]
    %v53 = vld [vmem:[%s4] sm:$0xf]
    %v56 = vunpack.c.l.s4 1983009808
    %v57 = vunpack.c.0.s8 %v56
    %v58 = vlaneseq
    %v59 = vshrl.u32 %v58, 7
    %v60 = vsub.s32 %v57, %v59
    %v61 = vrot.slane %v53, %v60
    %v62 = vcombine.high %v61, %v61
    %vm65 = vcmask 1041408
    %v66 = vsel %vm65, %v61, 0.0
    %v67 = vsel %vm65, %v62, 0.0
    %v68 = vadd.f32 %v66, %v67
    %69 = vadd.xlane.f32.xlu0 %v68
    %v70 = vpop.xlane.xlu0 %69
    %v71 = vrot.slane %v70, 4
    %v72 = vadd.f32 %v70, %v71
    %v73 = vrot.slane %v72, 2
    %v74 = vadd.f32 %v72, %v73
    %v75 = vrot.slane %v74, 1
    %v76 = vadd.f32 %v74, %v75
    %s77 = vtos %v76
    %v78 = vstv %s77
    %v79 = vrcp.pop %v78
    %s80 = vtos %v79
    %v81 = vld [vmem:[#allocation2] sm:$0xf]
    %v82 = vld [vmem:[#allocation2 + $0x4] sm:$0xf]
    %v83 = vunpack.c.l.bf16 %v81
    %v84 = vunpack.c.l.bf16 %v82
    %v85 = vmul.f32 %v83, %v83
    %v86 = vmul.f32 %v84, %v84
    %vm87 = vcmask 261120
    %v88 = vsel %vm87, %v85, 0.0
    %89 = vadd.xlane.f32.xlu0 %v88
    %v90 = vpop.xlane.xlu0 %89
    %v91 = vsel %vm87, %v86, 0.0
    %92 = vadd.xlane.f32.xlu0 %v91
    %v93 = vpop.xlane.xlu0 %92
    %v94 = vrsqrt.pop %v90
    %v95 = vmul.f32 %v90, %v94
    %vm96 = vcmp.eq.f32.partialorder %v90, inf
    %v97 = vsel %vm96, %v90, %v95
    %vm98 = vcmp.eq.f32.partialorder %v90, 0.0
    %v99 = vand.u32 %v90, 2147483648
    %v100 = vsel %vm98, %v99, %v97
    %v101 = vrsqrt.pop %v93
    %v102 = vmul.f32 %v93, %v101
    %vm103 = vcmp.eq.f32.partialorder %v93, inf
    %v104 = vsel %vm103, %v93, %v102
    %vm105 = vcmp.eq.f32.partialorder %v93, 0.0
    %v106 = vand.u32 %v93, 2147483648
    %v107 = vsel %vm105, %v106, %v104
    %v108 = vmax.f32 %v100, 1e-12
    %v109 = vmax.f32 %v107, 1e-12
    %v110 = vrcp.pop %v108
    %v111 = vmul.f32 %v83, %v110
    %v112 = vrcp.pop %v109
    %v113 = vmul.f32 %v84, %v112
    %v114 = vpack.c.bf16 %v113, %v111
    %v115 = vsub.f32 1.0, %v52
    %v117 = vlaneseq
    %v118 = vshrl.u32 %v117, 7
    %v119 = vsub.s32 0, %v118
    %v120 = vrot.slane %v115, %v119
    %v121 = vlaneseq
    %v122 = vshrl.u32 %v121, 7
    %v123 = vsub.s32 2, %v122
    %v124 = vrot.slane %v115, %v123
    %v128 = vlaneseq
    %v129 = vshrl.u32 %v128, 7
    %v130 = vsub.s32 0, %v129
    %v131 = vrot.slane %v52, %v130
    %v132 = vlaneseq
    %v133 = vshrl.u32 %v132, 7
    %v134 = vsub.s32 2, %v133
    %v135 = vrot.slane %v52, %v134
    %vm138 = vcmask 1040384
    %v139 = vsel %vm138, %v120, %v131
    %v140 = vsel %vm138, %v124, %v135
    %v141 = vstv %s80
    %v142 = vmul.f32 %v53, %v141
    %s143 = scalar_lea.vmem [#allocation2], 8
    %v144 = vld [vmem:[%s143] sm:$0xf]
    %v145 = vld [vmem:[%s143 + $0x4] sm:$0xf]
    %v146 = vunpack.c.l.bf16 %v144
    %v147 = vunpack.c.l.bf16 %v145
    %v148 = vmul.f32 %v146, %v146
    %v149 = vmul.f32 %v147, %v147
    %v150 = vsel %vm87, %v148, 0.0
    %151 = vadd.xlane.f32.xlu0 %v150
    %v152 = vpop.xlane.xlu0 %151
    %v153 = vsel %vm87, %v149, 0.0
    %154 = vadd.xlane.f32.xlu0 %v153
    %v155 = vpop.xlane.xlu0 %154
    %v156 = vrsqrt.pop %v152
    %v157 = vmul.f32 %v152, %v156
    %vm158 = vcmp.eq.f32.partialorder %v152, inf
    %v159 = vsel %vm158, %v152, %v157
    %vm160 = vcmp.eq.f32.partialorder %v152, 0.0
    %v161 = vand.u32 %v152, 2147483648
    %v162 = vsel %vm160, %v161, %v159
    %v163 = vrsqrt.pop %v155
    %v164 = vmul.f32 %v155, %v163
    %vm165 = vcmp.eq.f32.partialorder %v155, inf
    %v166 = vsel %vm165, %v155, %v164
    %vm167 = vcmp.eq.f32.partialorder %v155, 0.0
    %v168 = vand.u32 %v155, 2147483648
    %v169 = vsel %vm167, %v168, %v166
    %v170 = vmax.f32 %v162, 1e-12
    %v171 = vmax.f32 %v169, 1e-12
    %v172 = vrcp.pop %v170
    %v173 = vmul.f32 %v146, %v172
    %v174 = vrcp.pop %v171
    %v175 = vmul.f32 %v147, %v174
    %v176 = vpack.c.bf16 %v175, %v173
    %v177 = vlaneseq
    %v178 = vshrl.u32 %v177, 7
    %v179 = vsub.s32 1, %v178
    %v180 = vrot.slane %v115, %v179
    %v181 = vlaneseq
    %v182 = vshrl.u32 %v181, 7
    %v183 = vsub.s32 3, %v182
    %v184 = vrot.slane %v115, %v183
    %v187 = vlaneseq
    %v188 = vshrl.u32 %v187, 7
    %v189 = vsub.s32 1, %v188
    %v190 = vrot.slane %v52, %v189
    %v191 = vlaneseq
    %v192 = vshrl.u32 %v191, 7
    %v193 = vsub.s32 3, %v192
    %v194 = vrot.slane %v52, %v193
    %v197 = vsel %vm138, %v180, %v190
    %v198 = vsel %vm138, %v184, %v194
    %v199 = vld [vmem:[%s1] sm:$0x3]
    %v200 = vpack.c.bf16 %v199, %v199
    %v202 = vsel %vm87, %v200, 0
    %v205 = vsel %vm87, %v114, 0
    %207 = vmatprep.subr.bf16.mxu0 0
    %208 = vmatpush1.bf16.xpose.msra.mxu0 %v205
    %209 = vmatprep.subr.bf16.mxu0 0
    %210 = vmatpush1.bf16.xpose.msra.mxu0 0
    %211 = vmatprep.subr.bf16.mxu0 0
    %212 = vmatpush1.bf16.xpose.msra.mxu0 0
    %213 = vmatprep.subr.bf16.mxu0 0
    %214 = vmatpush1.bf16.xpose.msra.mxu0 0
    %215 = vmatprep.subr.bf16.mxu0 0
    %216 = vmatpush1.bf16.xpose.msra.mxu0 0
    %217 = vmatprep.subr.bf16.mxu0 0
    %218 = vmatpush1.bf16.xpose.msra.mxu0 0
    %219 = vmatprep.subr.bf16.mxu0 0
    %220 = vmatpush1.bf16.xpose.msra.mxu0 0
    %221 = vmatprep.subr.bf16.mxu0 0
    %222 = vmatpush1.bf16.xpose.msra.mxu0 0
    %223 = vmatprep.subr.bf16.mxu0 0
    %224 = vmatpush1.bf16.xpose.msra.mxu0 0
    %225 = vmatprep.subr.bf16.mxu0 0
    %226 = vmatpush1.bf16.xpose.msra.mxu0 0
    %227 = vmatprep.subr.bf16.mxu0 0
    %228 = vmatpush1.bf16.xpose.msra.mxu0 0
    %229 = vmatprep.subr.bf16.mxu0 0
    %230 = vmatpush1.bf16.xpose.msra.mxu0 0
    %231 = vmatprep.subr.bf16.mxu0 0
    %232 = vmatpush1.bf16.xpose.msra.mxu0 0
    %233 = vmatprep.subr.bf16.mxu0 0
    %234 = vmatpush1.bf16.xpose.msra.mxu0 0
    %235 = vmatprep.subr.bf16.mxu0 0
    %236 = vmatpush1.bf16.xpose.msra.mxu0 0
    %237 = vmatprep.subr.bf16.mxu0 0
    %238 = vmatpush1.bf16.xpose.msra.mxu0 0
    %239 = vmatprep.mubr.bf16.mxu0 0
    %240 = vmatmul.mubr.bf16.gmra.mrb[0].mxu0 %v202
    %v241 = vpop.f32.mrb[0].mxu0
    %v242 = vadd.f32 0.0, %v241
    %v243 = vpop.f32.mrb[0].mxu0
    %v244 = vpop.f32.mrb[0].mxu0
    %v245 = vpop.f32.mrb[0].mxu0
    %246 = vdwg.mxu0
    %v247 = vpack.c.bf16 %v242, %v242
    %v250 = vunpack.c.l.b16 %v50
    %v251 = vunpack.c.h.b16 %v50
    %v252 = vunpack.c.l.b16 %v51
    %v253 = vunpack.c.h.b16 %v51
    %v254 = vpack.c.b16 %v252, %v250
    %v255 = vpack.c.b16 %v253, %v251
    %vm258 = vcmask 130048
    %v260 = vsel %vm258, %v247, 0
    %262 = vmatprep.subr.bf16.mxu0 %v255
    %263 = vmatpush1.bf16.msra.mxu0 %v254
    %264 = vmatprep.subr.bf16.mxu0 0
    %265 = vmatpush1.bf16.msra.mxu0 0
    %266 = vmatprep.subr.bf16.mxu0 0
    %267 = vmatpush1.bf16.msra.mxu0 0
    %268 = vmatprep.subr.bf16.mxu0 0
    %269 = vmatpush1.bf16.msra.mxu0 0
    %270 = vmatprep.subr.bf16.mxu0 0
    %271 = vmatpush1.bf16.msra.mxu0 0
    %272 = vmatprep.subr.bf16.mxu0 0
    %273 = vmatpush1.bf16.msra.mxu0 0
    %274 = vmatprep.subr.bf16.mxu0 0
    %275 = vmatpush1.bf16.msra.mxu0 0
    %276 = vmatprep.subr.bf16.mxu0 0
    %277 = vmatpush1.bf16.msra.mxu0 0
    %278 = vmatprep.subr.bf16.mxu0 0
    %279 = vmatpush1.bf16.msra.mxu0 0
    %280 = vmatprep.subr.bf16.mxu0 0
    %281 = vmatpush1.bf16.msra.mxu0 0
    %282 = vmatprep.subr.bf16.mxu0 0
    %283 = vmatpush1.bf16.msra.mxu0 0
    %284 = vmatprep.subr.bf16.mxu0 0
    %285 = vmatpush1.bf16.msra.mxu0 0
    %286 = vmatprep.subr.bf16.mxu0 0
    %287 = vmatpush1.bf16.msra.mxu0 0
    %288 = vmatprep.subr.bf16.mxu0 0
    %289 = vmatpush1.bf16.msra.mxu0 0
    %290 = vmatprep.subr.bf16.mxu0 0
    %291 = vmatpush1.bf16.msra.mxu0 0
    %292 = vmatprep.subr.bf16.mxu0 0
    %293 = vmatpush1.bf16.msra.mxu0 0
    %294 = vmatprep.mubr.bf16.mxu0 0
    %295 = vmatmul.mubr.bf16.gmra.mrb[0].mxu0 %v260
    %v296 = vpop.f32.mrb[0].mxu0
    %v297 = vadd.f32 0.0, %v296
    %v298 = vpop.f32.mrb[0].mxu0
    %v299 = vadd.f32 0.0, %v298
    %v300 = vpop.f32.mrb[0].mxu0
    %v301 = vpop.f32.mrb[0].mxu0
    %302 = vdwg.mxu0
    %v305 = vrot.slane %v297, 1
    %v306 = vrot.slane %v299, 1
    %v309 = vmax.f32 %v297, %v305
    %v310 = vmax.f32 %v299, %v306
    %v311 = vsub.f32 %v297, %v309
    %v312 = vsub.f32 %v299, %v310
    %v313 = vmul.f32 %v311, 1.442695
    %v314 = vpow.pop %v313
    %v315 = vmul.f32 %v312, 1.442695
    %v316 = vpow.pop %v315
    %v319 = vrot.slane %v309, 7
    %v320 = vrot.slane %v310, 7
    %v323 = vsub.f32 %v297, %v319
    %v324 = vsub.f32 %v299, %v320
    %v325 = vmul.f32 %v323, 1.442695
    %v326 = vpow.pop %v325
    %v327 = vmul.f32 %v324, 1.442695
    %v328 = vpow.pop %v327
    %v331 = vrot.slane %v326, 1
    %v332 = vrot.slane %v328, 1
    %v335 = vadd.f32 %v314, %v331
    %v336 = vadd.f32 %v316, %v332
    %v337 = vrcp.pop %v335
    %v338 = vmul.f32 1.0, %v337
    %v339 = vrcp.pop %v336
    %v340 = vmul.f32 1.0, %v339
    %v341 = vmul.f32 %v314, %v338
    %v342 = vmul.f32 %v316, %v340
    %v345 = vrot.slane %v338, 7
    %v346 = vrot.slane %v340, 7
    %v349 = vmul.f32 %v326, %v345
    %v350 = vmul.f32 %v328, %v346
    %v351 = vsel %vm138, %v341, %v349
    %v352 = vsel %vm138, %v342, %v350
    %v353 = vsub.f32 %v351, %v139
    %v354 = vsub.f32 %v352, %v140
    %v356 = vlaneseq
    %v357 = vshrl.u32 %v356, 7
    %v358 = vsub.s32 0, %v357
    %v359 = vrot.slane %v142, %v358
    %v360 = vlaneseq
    %v361 = vshrl.u32 %v360, 7
    %v362 = vsub.s32 2, %v361
    %v363 = vrot.slane %v142, %v362
    %v366 = vlaneseq
    %v367 = vshrl.u32 %v366, 7
    %v368 = vsub.s32 0, %v367
    %v369 = vrot.slane %v359, %v368
    %v370 = vlaneseq
    %v371 = vshrl.u32 %v370, 7
    %v372 = vsub.s32 0, %v371
    %v373 = vrot.slane %v363, %v372
    %v374 = vmul.f32 %v353, %v369
    %v375 = vmul.f32 %v354, %v373
    %v376 = vpack.c.bf16 %v374, %v374
    %v377 = vpack.c.bf16 %v375, %v375
    %378 = vmatprep.subr.bf16.mxu0 %v255
    %379 = vmatpush1.bf16.xpose.msra.mxu0 %v254
    %380 = vmatprep.subr.bf16.mxu0 0
    %381 = vmatpush1.bf16.xpose.msra.mxu0 0
    %382 = vmatprep.subr.bf16.mxu0 0
    %383 = vmatpush1.bf16.xpose.msra.mxu0 0
    %384 = vmatprep.subr.bf16.mxu0 0
    %385 = vmatpush1.bf16.xpose.msra.mxu0 0
    %386 = vmatprep.subr.bf16.mxu0 0
    %387 = vmatpush1.bf16.xpose.msra.mxu0 0
    %388 = vmatprep.subr.bf16.mxu0 0
    %389 = vmatpush1.bf16.xpose.msra.mxu0 0
    %390 = vmatprep.subr.bf16.mxu0 0
    %391 = vmatpush1.bf16.xpose.msra.mxu0 0
    %392 = vmatprep.subr.bf16.mxu0 0
    %393 = vmatpush1.bf16.xpose.msra.mxu0 0
    %394 = vmatprep.subr.bf16.mxu0 0
    %395 = vmatpush1.bf16.xpose.msra.mxu0 0
    %396 = vmatprep.subr.bf16.mxu0 0
    %397 = vmatpush1.bf16.xpose.msra.mxu0 0
    %398 = vmatprep.subr.bf16.mxu0 0
    %399 = vmatpush1.bf16.xpose.msra.mxu0 0
    %400 = vmatprep.subr.bf16.mxu0 0
    %401 = vmatpush1.bf16.xpose.msra.mxu0 0
    %402 = vmatprep.subr.bf16.mxu0 0
    %403 = vmatpush1.bf16.xpose.msra.mxu0 0
    %404 = vmatprep.subr.bf16.mxu0 0
    %405 = vmatpush1.bf16.xpose.msra.mxu0 0
    %406 = vmatprep.subr.bf16.mxu0 0
    %407 = vmatpush1.bf16.xpose.msra.mxu0 0
    %408 = vmatprep.subr.bf16.mxu0 0
    %409 = vmatpush1.bf16.xpose.msra.mxu0 0
    %410 = vmatprep.mubr.bf16.mxu0 %v377
    %411 = vmatmul.mubr.bf16.gmra.mrb[0].mxu0 %v376
    %v412 = vpop.f32.mrb[0].mxu0
    %v413 = vadd.f32 0.0, %v412
    %v414 = vpop.f32.mrb[0].mxu0
    %v415 = vpop.f32.mrb[0].mxu0
    %v416 = vpop.f32.mrb[0].mxu0
    %417 = vdwg.mxu0
    %v418 = vpack.c.bf16 %v413, %v413
    %v420 = vsel %vm87, %v176, 0
    %422 = vmatprep.subr.bf16.mxu0 0
    %423 = vmatpush1.bf16.xpose.msra.mxu0 %v420
    %424 = vmatprep.subr.bf16.mxu0 0
    %425 = vmatpush1.bf16.xpose.msra.mxu0 0
    %426 = vmatprep.subr.bf16.mxu0 0
    %427 = vmatpush1.bf16.xpose.msra.mxu0 0
    %428 = vmatprep.subr.bf16.mxu0 0
    %429 = vmatpush1.bf16.xpose.msra.mxu0 0
    %430 = vmatprep.subr.bf16.mxu0 0
    %431 = vmatpush1.bf16.xpose.msra.mxu0 0
    %432 = vmatprep.subr.bf16.mxu0 0
    %433 = vmatpush1.bf16.xpose.msra.mxu0 0
    %434 = vmatprep.subr.bf16.mxu0 0
    %435 = vmatpush1.bf16.xpose.msra.mxu0 0
    %436 = vmatprep.subr.bf16.mxu0 0
    %437 = vmatpush1.bf16.xpose.msra.mxu0 0
    %438 = vmatprep.subr.bf16.mxu0 0
    %439 = vmatpush1.bf16.xpose.msra.mxu0 0
    %440 = vmatprep.subr.bf16.mxu0 0
    %441 = vmatpush1.bf16.xpose.msra.mxu0 0
    %442 = vmatprep.subr.bf16.mxu0 0
    %443 = vmatpush1.bf16.xpose.msra.mxu0 0
    %444 = vmatprep.subr.bf16.mxu0 0
    %445 = vmatpush1.bf16.xpose.msra.mxu0 0
    %446 = vmatprep.subr.bf16.mxu0 0
    %447 = vmatpush1.bf16.xpose.msra.mxu0 0
    %448 = vmatprep.subr.bf16.mxu0 0
    %449 = vmatpush1.bf16.xpose.msra.mxu0 0
    %450 = vmatprep.subr.bf16.mxu0 0
    %451 = vmatpush1.bf16.xpose.msra.mxu0 0
    %452 = vmatprep.subr.bf16.mxu0 0
    %453 = vmatpush1.bf16.xpose.msra.mxu0 0
    %454 = vmatprep.mubr.bf16.mxu0 0
    %455 = vmatmul.mubr.bf16.gmra.mrb[0].mxu0 %v202
    %v456 = vpop.f32.mrb[0].mxu0
    %v457 = vadd.f32 0.0, %v456
    %v458 = vpop.f32.mrb[0].mxu0
    %v459 = vpop.f32.mrb[0].mxu0
    %v460 = vpop.f32.mrb[0].mxu0
    %461 = vdwg.mxu0
    %v462 = vpack.c.bf16 %v457, %v457
    %v464 = vsel %vm258, %v462, 0
    %466 = vmatprep.subr.bf16.mxu0 %v255
    %467 = vmatpush1.bf16.msra.mxu0 %v254
    %468 = vmatprep.subr.bf16.mxu0 0
    %469 = vmatpush1.bf16.msra.mxu0 0
    %470 = vmatprep.subr.bf16.mxu0 0
    %471 = vmatpush1.bf16.msra.mxu0 0
    %472 = vmatprep.subr.bf16.mxu0 0
    %473 = vmatpush1.bf16.msra.mxu0 0
    %474 = vmatprep.subr.bf16.mxu0 0
    %475 = vmatpush1.bf16.msra.mxu0 0
    %476 = vmatprep.subr.bf16.mxu0 0
    %477 = vmatpush1.bf16.msra.mxu0 0
    %478 = vmatprep.subr.bf16.mxu0 0
    %479 = vmatpush1.bf16.msra.mxu0 0
    %480 = vmatprep.subr.bf16.mxu0 0
    %481 = vmatpush1.bf16.msra.mxu0 0
    %482 = vmatprep.subr.bf16.mxu0 0
    %483 = vmatpush1.bf16.msra.mxu0 0
    %484 = vmatprep.subr.bf16.mxu0 0
    %485 = vmatpush1.bf16.msra.mxu0 0
    %486 = vmatprep.subr.bf16.mxu0 0
    %487 = vmatpush1.bf16.msra.mxu0 0
    %488 = vmatprep.subr.bf16.mxu0 0
    %489 = vmatpush1.bf16.msra.mxu0 0
    %490 = vmatprep.subr.bf16.mxu0 0
    %491 = vmatpush1.bf16.msra.mxu0 0
    %492 = vmatprep.subr.bf16.mxu0 0
    %493 = vmatpush1.bf16.msra.mxu0 0
    %494 = vmatprep.subr.bf16.mxu0 0
    %495 = vmatpush1.bf16.msra.mxu0 0
    %496 = vmatprep.subr.bf16.mxu0 0
    %497 = vmatpush1.bf16.msra.mxu0 0
    %498 = vmatprep.mubr.bf16.mxu0 0
    %499 = vmatmul.mubr.bf16.gmra.mrb[0].mxu0 %v464
    %v500 = vpop.f32.mrb[0].mxu0
    %v501 = vadd.f32 0.0, %v500
    %v502 = vpop.f32.mrb[0].mxu0
    %v503 = vadd.f32 0.0, %v502
    %v504 = vpop.f32.mrb[0].mxu0
    %v505 = vpop.f32.mrb[0].mxu0
    %506 = vdwg.mxu0
    %v509 = vrot.slane %v501, 1
    %v510 = vrot.slane %v503, 1
    %v513 = vmax.f32 %v501, %v509
    %v514 = vmax.f32 %v503, %v510
    %v515 = vsub.f32 %v501, %v513
    %v516 = vsub.f32 %v503, %v514
    %v517 = vmul.f32 %v515, 1.442695
    %v518 = vpow.pop %v517
    %v519 = vmul.f32 %v516, 1.442695
    %v520 = vpow.pop %v519
    %v523 = vrot.slane %v513, 7
    %v524 = vrot.slane %v514, 7
    %v527 = vsub.f32 %v501, %v523
    %v528 = vsub.f32 %v503, %v524
    %v529 = vmul.f32 %v527, 1.442695
    %v530 = vpow.pop %v529
    %v531 = vmul.f32 %v528, 1.442695
    %v532 = vpow.pop %v531
    %v535 = vrot.slane %v530, 1
    %v536 = vrot.slane %v532, 1
    %v539 = vadd.f32 %v518, %v535
    %v540 = vadd.f32 %v520, %v536
    %v541 = vrcp.pop %v539
    %v542 = vmul.f32 1.0, %v541
    %v543 = vrcp.pop %v540
    %v544 = vmul.f32 1.0, %v543
    %v545 = vmul.f32 %v518, %v542
    %v546 = vmul.f32 %v520, %v544
    %v549 = vrot.slane %v542, 7
    %v550 = vrot.slane %v544, 7
    %v553 = vmul.f32 %v530, %v549
    %v554 = vmul.f32 %v532, %v550
    %v555 = vsel %vm138, %v545, %v553
    %v556 = vsel %vm138, %v546, %v554
    %v557 = vsub.f32 %v555, %v197
    %v558 = vsub.f32 %v556, %v198
    %v559 = vlaneseq
    %v560 = vshrl.u32 %v559, 7
    %v561 = vsub.s32 1, %v560
    %v562 = vrot.slane %v142, %v561
    %v563 = vlaneseq
    %v564 = vshrl.u32 %v563, 7
    %v565 = vsub.s32 3, %v564
    %v566 = vrot.slane %v142, %v565
    %v569 = vlaneseq
    %v570 = vshrl.u32 %v569, 7
    %v571 = vsub.s32 1, %v570
    %v572 = vrot.slane %v562, %v571
    %v573 = vlaneseq
    %v574 = vshrl.u32 %v573, 7
    %v575 = vsub.s32 1, %v574
    %v576 = vrot.slane %v566, %v575
    %v577 = vmul.f32 %v557, %v572
    %v578 = vmul.f32 %v558, %v576
    %v579 = vpack.c.bf16 %v577, %v577
    %v580 = vpack.c.bf16 %v578, %v578
    %581 = vmatprep.subr.bf16.mxu0 %v255
    %582 = vmatpush1.bf16.xpose.msra.mxu0 %v254
    %583 = vmatprep.subr.bf16.mxu0 0
    %584 = vmatpush1.bf16.xpose.msra.mxu0 0
    %585 = vmatprep.subr.bf16.mxu0 0
    %586 = vmatpush1.bf16.xpose.msra.mxu0 0
    %587 = vmatprep.subr.bf16.mxu0 0
    %588 = vmatpush1.bf16.xpose.msra.mxu0 0
    %589 = vmatprep.subr.bf16.mxu0 0
    %590 = vmatpush1.bf16.xpose.msra.mxu0 0
    %591 = vmatprep.subr.bf16.mxu0 0
    %592 = vmatpush1.bf16.xpose.msra.mxu0 0
    %593 = vmatprep.subr.bf16.mxu0 0
    %594 = vmatpush1.bf16.xpose.msra.mxu0 0
    %595 = vmatprep.subr.bf16.mxu0 0
    %596 = vmatpush1.bf16.xpose.msra.mxu0 0
    %597 = vmatprep.subr.bf16.mxu0 0
    %598 = vmatpush1.bf16.xpose.msra.mxu0 0
    %599 = vmatprep.subr.bf16.mxu0 0
    %600 = vmatpush1.bf16.xpose.msra.mxu0 0
    %601 = vmatprep.subr.bf16.mxu0 0
    %602 = vmatpush1.bf16.xpose.msra.mxu0 0
    %603 = vmatprep.subr.bf16.mxu0 0
    %604 = vmatpush1.bf16.xpose.msra.mxu0 0
    %605 = vmatprep.subr.bf16.mxu0 0
    %606 = vmatpush1.bf16.xpose.msra.mxu0 0
    %607 = vmatprep.subr.bf16.mxu0 0
    %608 = vmatpush1.bf16.xpose.msra.mxu0 0
    %609 = vmatprep.subr.bf16.mxu0 0
    %610 = vmatpush1.bf16.xpose.msra.mxu0 0
    %611 = vmatprep.subr.bf16.mxu0 0
    %612 = vmatpush1.bf16.xpose.msra.mxu0 0
    %613 = vmatprep.mubr.bf16.mxu0 %v580
    %614 = vmatmul.mubr.bf16.gmra.mrb[0].mxu0 %v579
    %v615 = vpop.f32.mrb[0].mxu0
    %v616 = vadd.f32 0.0, %v615
    %v617 = vpop.f32.mrb[0].mxu0
    %v618 = vpop.f32.mrb[0].mxu0
    %v619 = vpop.f32.mrb[0].mxu0
    %620 = vdwg.mxu0
    %v621 = vpack.c.bf16 %v616, %v616
    %v623 = vsel %vm258, %v621, 0
    %625 = vmatprep.subr.bf16.mxu0 0
    %626 = vmatpush1.bf16.msra.mxu0 %v176
    %627 = vmatprep.subr.bf16.mxu0 0
    %628 = vmatpush1.bf16.msra.mxu0 0
    %629 = vmatprep.subr.bf16.mxu0 0
    %630 = vmatpush1.bf16.msra.mxu0 0
    %631 = vmatprep.subr.bf16.mxu0 0
    %632 = vmatpush1.bf16.msra.mxu0 0
    %633 = vmatprep.subr.bf16.mxu0 0
    %634 = vmatpush1.bf16.msra.mxu0 0
    %635 = vmatprep.subr.bf16.mxu0 0
    %636 = vmatpush1.bf16.msra.mxu0 0
    %637 = vmatprep.subr.bf16.mxu0 0
    %638 = vmatpush1.bf16.msra.mxu0 0
    %639 = vmatprep.subr.bf16.mxu0 0
    %640 = vmatpush1.bf16.msra.mxu0 0
    %641 = vmatprep.subr.bf16.mxu0 0
    %642 = vmatpush1.bf16.msra.mxu0 0
    %643 = vmatprep.subr.bf16.mxu0 0
    %644 = vmatpush1.bf16.msra.mxu0 0
    %645 = vmatprep.subr.bf16.mxu0 0
    %646 = vmatpush1.bf16.msra.mxu0 0
    %647 = vmatprep.subr.bf16.mxu0 0
    %648 = vmatpush1.bf16.msra.mxu0 0
    %649 = vmatprep.subr.bf16.mxu0 0
    %650 = vmatpush1.bf16.msra.mxu0 0
    %651 = vmatprep.subr.bf16.mxu0 0
    %652 = vmatpush1.bf16.msra.mxu0 0
    %653 = vmatprep.subr.bf16.mxu0 0
    %654 = vmatpush1.bf16.msra.mxu0 0
    %655 = vmatprep.subr.bf16.mxu0 0
    %656 = vmatpush1.bf16.msra.mxu0 0
    %657 = vmatprep.mubr.bf16.mxu0 0
    %658 = vmatmul.mubr.bf16.gmra.mrb[0].mxu0 %v623
    %v659 = vpop.f32.mrb[0].mxu0
    %v660 = vadd.f32 0.0, %v659
    %v661 = vpop.f32.mrb[0].mxu0
    %v662 = vpop.f32.mrb[0].mxu0
    %v663 = vpop.f32.mrb[0].mxu0
    %664 = vdwg.mxu0
    %v666 = vsel %vm258, %v418, 0
    %668 = vmatprep.subr.bf16.mxu0 0
    %669 = vmatpush1.bf16.msra.mxu0 %v114
    %670 = vmatprep.subr.bf16.mxu0 0
    %671 = vmatpush1.bf16.msra.mxu0 0
    %672 = vmatprep.subr.bf16.mxu0 0
    %673 = vmatpush1.bf16.msra.mxu0 0
    %674 = vmatprep.subr.bf16.mxu0 0
    %675 = vmatpush1.bf16.msra.mxu0 0
    %676 = vmatprep.subr.bf16.mxu0 0
    %677 = vmatpush1.bf16.msra.mxu0 0
    %678 = vmatprep.subr.bf16.mxu0 0
    %679 = vmatpush1.bf16.msra.mxu0 0
    %680 = vmatprep.subr.bf16.mxu0 0
    %681 = vmatpush1.bf16.msra.mxu0 0
    %682 = vmatprep.subr.bf16.mxu0 0
    %683 = vmatpush1.bf16.msra.mxu0 0
    %684 = vmatprep.subr.bf16.mxu0 0
    %685 = vmatpush1.bf16.msra.mxu0 0
    %686 = vmatprep.subr.bf16.mxu0 0
    %687 = vmatpush1.bf16.msra.mxu0 0
    %688 = vmatprep.subr.bf16.mxu0 0
    %689 = vmatpush1.bf16.msra.mxu0 0
    %690 = vmatprep.subr.bf16.mxu0 0
    %691 = vmatpush1.bf16.msra.mxu0 0
    %692 = vmatprep.subr.bf16.mxu0 0
    %693 = vmatpush1.bf16.msra.mxu0 0
    %694 = vmatprep.subr.bf16.mxu0 0
    %695 = vmatpush1.bf16.msra.mxu0 0
    %696 = vmatprep.subr.bf16.mxu0 0
    %697 = vmatpush1.bf16.msra.mxu0 0
    %698 = vmatprep.subr.bf16.mxu0 0
    %699 = vmatpush1.bf16.msra.mxu0 0
    %700 = vmatprep.mubr.bf16.mxu0 0
    %701 = vmatmul.mubr.bf16.gmra.mrb[0].mxu0 %v666
    %v702 = vpop.f32.mrb[0].mxu0
    %v703 = vadd.f32 %v660, %v702
    %v704 = vpop.f32.mrb[0].mxu0
    %v705 = vpop.f32.mrb[0].mxu0
    %v706 = vpop.f32.mrb[0].mxu0
    %707 = vdwg.mxu0
    %v708 = vmul.f32 %v703, 0.1
    %v709 = vsub.f32 %v199, %v708
    %v710 = vpack.c.bf16 %v709, %v709
    %v712 = vsel %vm87, %v710, 0
    %714 = vmatprep.subr.bf16.mxu0 0
    %715 = vmatpush1.bf16.xpose.msra.mxu0 %v205
    %716 = vmatprep.subr.bf16.mxu0 0
    %717 = vmatpush1.bf16.xpose.msra.mxu0 0
    %718 = vmatprep.subr.bf16.mxu0 0
    %719 = vmatpush1.bf16.xpose.msra.mxu0 0
    %720 = vmatprep.subr.bf16.mxu0 0
    %721 = vmatpush1.bf16.xpose.msra.mxu0 0
    %722 = vmatprep.subr.bf16.mxu0 0
    %723 = vmatpush1.bf16.xpose.msra.mxu0 0
    %724 = vmatprep.subr.bf16.mxu0 0
    %725 = vmatpush1.bf16.xpose.msra.mxu0 0
    %726 = vmatprep.subr.bf16.mxu0 0
    %727 = vmatpush1.bf16.xpose.msra.mxu0 0
    %728 = vmatprep.subr.bf16.mxu0 0
    %729 = vmatpush1.bf16.xpose.msra.mxu0 0
    %730 = vmatprep.subr.bf16.mxu0 0
    %731 = vmatpush1.bf16.xpose.msra.mxu0 0
    %732 = vmatprep.subr.bf16.mxu0 0
    %733 = vmatpush1.bf16.xpose.msra.mxu0 0
    %734 = vmatprep.subr.bf16.mxu0 0
    %735 = vmatpush1.bf16.xpose.msra.mxu0 0
    %736 = vmatprep.subr.bf16.mxu0 0
    %737 = vmatpush1.bf16.xpose.msra.mxu0 0
    %738 = vmatprep.subr.bf16.mxu0 0
    %739 = vmatpush1.bf16.xpose.msra.mxu0 0
    %740 = vmatprep.subr.bf16.mxu0 0
    %741 = vmatpush1.bf16.xpose.msra.mxu0 0
    %742 = vmatprep.subr.bf16.mxu0 0
    %743 = vmatpush1.bf16.xpose.msra.mxu0 0
    %744 = vmatprep.subr.bf16.mxu0 0
    %745 = vmatpush1.bf16.xpose.msra.mxu0 0
    %746 = vmatprep.mubr.bf16.mxu0 0
    %747 = vmatmul.mubr.bf16.gmra.mrb[0].mxu0 %v712
    %v748 = vpop.f32.mrb[0].mxu0
    %v749 = vadd.f32 0.0, %v748
    %v750 = vpop.f32.mrb[0].mxu0
    %v751 = vpop.f32.mrb[0].mxu0
    %v752 = vpop.f32.mrb[0].mxu0
    %753 = vdwg.mxu0
    %v754 = vpack.c.bf16 %v749, %v749
    %v756 = vsel %vm258, %v754, 0
    %758 = vmatprep.subr.bf16.mxu0 %v255
    %759 = vmatpush1.bf16.msra.mxu0 %v254
    %760 = vmatprep.subr.bf16.mxu0 0
    %761 = vmatpush1.bf16.msra.mxu0 0
    %762 = vmatprep.subr.bf16.mxu0 0
    %763 = vmatpush1.bf16.msra.mxu0 0
    %764 = vmatprep.subr.bf16.mxu0 0
    %765 = vmatpush1.bf16.msra.mxu0 0
    %766 = vmatprep.subr.bf16.mxu0 0
    %767 = vmatpush1.bf16.msra.mxu0 0
    %768 = vmatprep.subr.bf16.mxu0 0
    %769 = vmatpush1.bf16.msra.mxu0 0
    %770 = vmatprep.subr.bf16.mxu0 0
    %771 = vmatpush1.bf16.msra.mxu0 0
    %772 = vmatprep.subr.bf16.mxu0 0
    %773 = vmatpush1.bf16.msra.mxu0 0
    %774 = vmatprep.subr.bf16.mxu0 0
    %775 = vmatpush1.bf16.msra.mxu0 0
    %776 = vmatprep.subr.bf16.mxu0 0
    %777 = vmatpush1.bf16.msra.mxu0 0
    %778 = vmatprep.subr.bf16.mxu0 0
    %779 = vmatpush1.bf16.msra.mxu0 0
    %780 = vmatprep.subr.bf16.mxu0 0
    %781 = vmatpush1.bf16.msra.mxu0 0
    %782 = vmatprep.subr.bf16.mxu0 0
    %783 = vmatpush1.bf16.msra.mxu0 0
    %784 = vmatprep.subr.bf16.mxu0 0
    %785 = vmatpush1.bf16.msra.mxu0 0
    %786 = vmatprep.subr.bf16.mxu0 0
    %787 = vmatpush1.bf16.msra.mxu0 0
    %788 = vmatprep.subr.bf16.mxu0 0
    %789 = vmatpush1.bf16.msra.mxu0 0
    %790 = vmatprep.mubr.bf16.mxu0 0
    %791 = vmatmul.mubr.bf16.gmra.mrb[0].mxu0 %v756
    %v792 = vpop.f32.mrb[0].mxu0
    %v793 = vadd.f32 0.0, %v792
    %v794 = vpop.f32.mrb[0].mxu0
    %v795 = vadd.f32 0.0, %v794
    %v796 = vpop.f32.mrb[0].mxu0
    %v797 = vpop.f32.mrb[0].mxu0
    %798 = vdwg.mxu0
    %v801 = vrot.slane %v793, 1
    %v802 = vrot.slane %v795, 1
    %v805 = vmax.f32 %v793, %v801
    %v806 = vmax.f32 %v795, %v802
    %v807 = vsub.f32 %v793, %v805
    %v808 = vsub.f32 %v795, %v806
    %v809 = vmul.f32 %v807, 1.442695
    %v810 = vpow.pop %v809
    %v811 = vmul.f32 %v808, 1.442695
    %v812 = vpow.pop %v811
    %v815 = vrot.slane %v805, 7
    %v816 = vrot.slane %v806, 7
    %v819 = vsub.f32 %v793, %v815
    %v820 = vsub.f32 %v795, %v816
    %v821 = vmul.f32 %v819, 1.442695
    %v822 = vpow.pop %v821
    %v823 = vmul.f32 %v820, 1.442695
    %v824 = vpow.pop %v823
    %v827 = vrot.slane %v822, 1
    %v828 = vrot.slane %v824, 1
    %v831 = vadd.f32 %v810, %v827
    %v832 = vadd.f32 %v812, %v828
    %v833 = vrcp.pop %v831
    %v834 = vmul.f32 1.0, %v833
    %v835 = vrcp.pop %v832
    %v836 = vmul.f32 1.0, %v835
    %v837 = vmul.f32 %v810, %v834
    %v838 = vmul.f32 %v812, %v836
    %v841 = vrot.slane %v834, 7
    %v842 = vrot.slane %v836, 7
    %v845 = vmul.f32 %v822, %v841
    %v846 = vmul.f32 %v824, %v842
    %v847 = vsel %vm138, %v837, %v845
    %v848 = vsel %vm138, %v838, %v846
    %v849 = vsub.f32 %v847, %v139
    %v850 = vsub.f32 %v848, %v140
    %v851 = vmul.f32 %v849, %v369
    %v852 = vmul.f32 %v850, %v373
    %v853 = vpack.c.bf16 %v851, %v851
    %v854 = vpack.c.bf16 %v852, %v852
    %855 = vmatprep.subr.bf16.mxu0 %v255
    %856 = vmatpush1.bf16.xpose.msra.mxu0 %v254
    %857 = vmatprep.subr.bf16.mxu0 0
    %858 = vmatpush1.bf16.xpose.msra.mxu0 0
    %859 = vmatprep.subr.bf16.mxu0 0
    %860 = vmatpush1.bf16.xpose.msra.mxu0 0
    %861 = vmatprep.subr.bf16.mxu0 0
    %862 = vmatpush1.bf16.xpose.msra.mxu0 0
    %863 = vmatprep.subr.bf16.mxu0 0
    %864 = vmatpush1.bf16.xpose.msra.mxu0 0
    %865 = vmatprep.subr.bf16.mxu0 0
    %866 = vmatpush1.bf16.xpose.msra.mxu0 0
    %867 = vmatprep.subr.bf16.mxu0 0
    %868 = vmatpush1.bf16.xpose.msra.mxu0 0
    %869 = vmatprep.subr.bf16.mxu0 0
    %870 = vmatpush1.bf16.xpose.msra.mxu0 0
    %871 = vmatprep.subr.bf16.mxu0 0
    %872 = vmatpush1.bf16.xpose.msra.mxu0 0
    %873 = vmatprep.subr.bf16.mxu0 0
    %874 = vmatpush1.bf16.xpose.msra.mxu0 0
    %875 = vmatprep.subr.bf16.mxu0 0
    %876 = vmatpush1.bf16.xpose.msra.mxu0 0
    %877 = vmatprep.subr.bf16.mxu0 0
    %878 = vmatpush1.bf16.xpose.msra.mxu0 0
    %879 = vmatprep.subr.bf16.mxu0 0
    %880 = vmatpush1.bf16.xpose.msra.mxu0 0
    %881 = vmatprep.subr.bf16.mxu0 0
    %882 = vmatpush1.bf16.xpose.msra.mxu0 0
    %883 = vmatprep.subr.bf16.mxu0 0
    %884 = vmatpush1.bf16.xpose.msra.mxu0 0
    %885 = vmatprep.subr.bf16.mxu0 0
    %886 = vmatpush1.bf16.xpose.msra.mxu0 0
    %887 = vmatprep.mubr.bf16.mxu0 %v854
    %888 = vmatmul.mubr.bf16.gmra.mrb[0].mxu0 %v853
    %v889 = vpop.f32.mrb[0].mxu0
    %v890 = vadd.f32 0.0, %v889
    %v891 = vpop.f32.mrb[0].mxu0
    %v892 = vpop.f32.mrb[0].mxu0
    %v893 = vpop.f32.mrb[0].mxu0
    %894 = vdwg.mxu0
    %v895 = vpack.c.bf16 %v890, %v890
    %896 = vmatprep.subr.bf16.mxu0 0
    %897 = vmatpush1.bf16.xpose.msra.mxu0 %v420
    %898 = vmatprep.subr.bf16.mxu0 0
    %899 = vmatpush1.bf16.xpose.msra.mxu0 0
    %900 = vmatprep.subr.bf16.mxu0 0
    %901 = vmatpush1.bf16.xpose.msra.mxu0 0
    %902 = vmatprep.subr.bf16.mxu0 0
    %903 = vmatpush1.bf16.xpose.msra.mxu0 0
    %904 = vmatprep.subr.bf16.mxu0 0
    %905 = vmatpush1.bf16.xpose.msra.mxu0 0
    %906 = vmatprep.subr.bf16.mxu0 0
    %907 = vmatpush1.bf16.xpose.msra.mxu0 0
    %908 = vmatprep.subr.bf16.mxu0 0
    %909 = vmatpush1.bf16.xpose.msra.mxu0 0
    %910 = vmatprep.subr.bf16.mxu0 0
    %911 = vmatpush1.bf16.xpose.msra.mxu0 0
    %912 = vmatprep.subr.bf16.mxu0 0
    %913 = vmatpush1.bf16.xpose.msra.mxu0 0
    %914 = vmatprep.subr.bf16.mxu0 0
    %915 = vmatpush1.bf16.xpose.msra.mxu0 0
    %916 = vmatprep.subr.bf16.mxu0 0
    %917 = vmatpush1.bf16.xpose.msra.mxu0 0
    %918 = vmatprep.subr.bf16.mxu0 0
    %919 = vmatpush1.bf16.xpose.msra.mxu0 0
    %920 = vmatprep.subr.bf16.mxu0 0
    %921 = vmatpush1.bf16.xpose.msra.mxu0 0
    %922 = vmatprep.subr.bf16.mxu0 0
    %923 = vmatpush1.bf16.xpose.msra.mxu0 0
    %924 = vmatprep.subr.bf16.mxu0 0
    %925 = vmatpush1.bf16.xpose.msra.mxu0 0
    %926 = vmatprep.subr.bf16.mxu0 0
    %927 = vmatpush1.bf16.xpose.msra.mxu0 0
    %928 = vmatprep.mubr.bf16.mxu0 0
    %929 = vmatmul.mubr.bf16.gmra.mrb[0].mxu0 %v712
    %v930 = vpop.f32.mrb[0].mxu0
    %v931 = vadd.f32 0.0, %v930
    %v932 = vpop.f32.mrb[0].mxu0
    %v933 = vpop.f32.mrb[0].mxu0
    %v934 = vpop.f32.mrb[0].mxu0
    %935 = vdwg.mxu0
    %v936 = vpack.c.bf16 %v931, %v931
    %v938 = vsel %vm258, %v936, 0
    %940 = vmatprep.subr.bf16.mxu0 %v255
    %941 = vmatpush1.bf16.msra.mxu0 %v254
    %942 = vmatprep.subr.bf16.mxu0 0
    %943 = vmatpush1.bf16.msra.mxu0 0
    %944 = vmatprep.subr.bf16.mxu0 0
    %945 = vmatpush1.bf16.msra.mxu0 0
    %946 = vmatprep.subr.bf16.mxu0 0
    %947 = vmatpush1.bf16.msra.mxu0 0
    %948 = vmatprep.subr.bf16.mxu0 0
    %949 = vmatpush1.bf16.msra.mxu0 0
    %950 = vmatprep.subr.bf16.mxu0 0
    %951 = vmatpush1.bf16.msra.mxu0 0
    %952 = vmatprep.subr.bf16.mxu0 0
    %953 = vmatpush1.bf16.msra.mxu0 0
    %954 = vmatprep.subr.bf16.mxu0 0
    %955 = vmatpush1.bf16.msra.mxu0 0
    %956 = vmatprep.subr.bf16.mxu0 0
    %957 = vmatpush1.bf16.msra.mxu0 0
    %958 = vmatprep.subr.bf16.mxu0 0
    %959 = vmatpush1.bf16.msra.mxu0 0
    %960 = vmatprep.subr.bf16.mxu0 0
    %961 = vmatpush1.bf16.msra.mxu0 0
    %962 = vmatprep.subr.bf16.mxu0 0
    %963 = vmatpush1.bf16.msra.mxu0 0
    %964 = vmatprep.subr.bf16.mxu0 0
    %965 = vmatpush1.bf16.msra.mxu0 0
    %966 = vmatprep.subr.bf16.mxu0 0
    %967 = vmatpush1.bf16.msra.mxu0 0
    %968 = vmatprep.subr.bf16.mxu0 0
    %969 = vmatpush1.bf16.msra.mxu0 0
    %970 = vmatprep.subr.bf16.mxu0 0
    %971 = vmatpush1.bf16.msra.mxu0 0
    %972 = vmatprep.mubr.bf16.mxu0 0
    %973 = vmatmul.mubr.bf16.gmra.mrb[0].mxu0 %v938
    %v974 = vpop.f32.mrb[0].mxu0
    %v975 = vadd.f32 0.0, %v974
    %v976 = vpop.f32.mrb[0].mxu0
    %v977 = vadd.f32 0.0, %v976
    %v978 = vpop.f32.mrb[0].mxu0
    %v979 = vpop.f32.mrb[0].mxu0
    %980 = vdwg.mxu0
    %v983 = vrot.slane %v975, 1
    %v984 = vrot.slane %v977, 1
    %v987 = vmax.f32 %v975, %v983
    %v988 = vmax.f32 %v977, %v984
    %v989 = vsub.f32 %v975, %v987
    %v990 = vsub.f32 %v977, %v988
    %v991 = vmul.f32 %v989, 1.442695
    %v992 = vpow.pop %v991
    %v993 = vmul.f32 %v990, 1.442695
    %v994 = vpow.pop %v993
    %v997 = vrot.slane %v987, 7
    %v998 = vrot.slane %v988, 7
    %v1001 = vsub.f32 %v975, %v997
    %v1002 = vsub.f32 %v977, %v998
    %v1003 = vmul.f32 %v1001, 1.442695
    %v1004 = vpow.pop %v1003
    %v1005 = vmul.f32 %v1002, 1.442695
    %v1006 = vpow.pop %v1005
    %v1009 = vrot.slane %v1004, 1
    %v1010 = vrot.slane %v1006, 1
    %v1013 = vadd.f32 %v992, %v1009
    %v1014 = vadd.f32 %v994, %v1010
    %v1015 = vrcp.pop %v1013
    %v1016 = vmul.f32 1.0, %v1015
    %v1017 = vrcp.pop %v1014
    %v1018 = vmul.f32 1.0, %v1017
    %v1019 = vmul.f32 %v992, %v1016
    %v1020 = vmul.f32 %v994, %v1018
    %v1023 = vrot.slane %v1016, 7
    %v1024 = vrot.slane %v1018, 7
    %v1027 = vmul.f32 %v1004, %v1023
    %v1028 = vmul.f32 %v1006, %v1024
    %v1029 = vsel %vm138, %v1019, %v1027
    %v1030 = vsel %vm138, %v1020, %v1028
    %v1031 = vsub.f32 %v1029, %v197
    %v1032 = vsub.f32 %v1030, %v198
    %v1033 = vmul.f32 %v1031, %v572
    %v1034 = vmul.f32 %v1032, %v576
    %v1035 = vpack.c.bf16 %v1033, %v1033
    %v1036 = vpack.c.bf16 %v1034, %v1034
    %1037 = vmatprep.subr.bf16.mxu0 %v255
    %1038 = vmatpush1.bf16.xpose.msra.mxu0 %v254
    %1039 = vmatprep.subr.bf16.mxu0 0
    %1040 = vmatpush1.bf16.xpose.msra.mxu0 0
    %1041 = vmatprep.subr.bf16.mxu0 0
    %1042 = vmatpush1.bf16.xpose.msra.mxu0 0
    %1043 = vmatprep.subr.bf16.mxu0 0
    %1044 = vmatpush1.bf16.xpose.msra.mxu0 0
    %1045 = vmatprep.subr.bf16.mxu0 0
    %1046 = vmatpush1.bf16.xpose.msra.mxu0 0
    %1047 = vmatprep.subr.bf16.mxu0 0
    %1048 = vmatpush1.bf16.xpose.msra.mxu0 0
    %1049 = vmatprep.subr.bf16.mxu0 0
    %1050 = vmatpush1.bf16.xpose.msra.mxu0 0
    %1051 = vmatprep.subr.bf16.mxu0 0
    %1052 = vmatpush1.bf16.xpose.msra.mxu0 0
    %1053 = vmatprep.subr.bf16.mxu0 0
    %1054 = vmatpush1.bf16.xpose.msra.mxu0 0
    %1055 = vmatprep.subr.bf16.mxu0 0
    %1056 = vmatpush1.bf16.xpose.msra.mxu0 0
    %1057 = vmatprep.subr.bf16.mxu0 0
    %1058 = vmatpush1.bf16.xpose.msra.mxu0 0
    %1059 = vmatprep.subr.bf16.mxu0 0
    %1060 = vmatpush1.bf16.xpose.msra.mxu0 0
    %1061 = vmatprep.subr.bf16.mxu0 0
    %1062 = vmatpush1.bf16.xpose.msra.mxu0 0
    %1063 = vmatprep.subr.bf16.mxu0 0
    %1064 = vmatpush1.bf16.xpose.msra.mxu0 0
    %1065 = vmatprep.subr.bf16.mxu0 0
    %1066 = vmatpush1.bf16.xpose.msra.mxu0 0
    %1067 = vmatprep.subr.bf16.mxu0 0
    %1068 = vmatpush1.bf16.xpose.msra.mxu0 0
    %1069 = vmatprep.mubr.bf16.mxu0 %v1036
    %1070 = vmatmul.mubr.bf16.gmra.mrb[0].mxu0 %v1035
    %v1071 = vpop.f32.mrb[0].mxu0
    %v1072 = vadd.f32 0.0, %v1071
    %v1073 = vpop.f32.mrb[0].mxu0
    %v1074 = vpop.f32.mrb[0].mxu0
    %v1075 = vpop.f32.mrb[0].mxu0
    %1076 = vdwg.mxu0
    %v1077 = vpack.c.bf16 %v1072, %v1072
    %v1079 = vsel %vm258, %v1077, 0
    %1081 = vmatprep.subr.bf16.mxu0 0
    %1082 = vmatpush1.bf16.msra.mxu0 %v176
    %1083 = vmatprep.subr.bf16.mxu0 0
    %1084 = vmatpush1.bf16.msra.mxu0 0
    %1085 = vmatprep.subr.bf16.mxu0 0
    %1086 = vmatpush1.bf16.msra.mxu0 0
    %1087 = vmatprep.subr.bf16.mxu0 0
    %1088 = vmatpush1.bf16.msra.mxu0 0
    %1089 = vmatprep.subr.bf16.mxu0 0
    %1090 = vmatpush1.bf16.msra.mxu0 0
    %1091 = vmatprep.subr.bf16.mxu0 0
    %1092 = vmatpush1.bf16.msra.mxu0 0
    %1093 = vmatprep.subr.bf16.mxu0 0
    %1094 = vmatpush1.bf16.msra.mxu0 0
    %1095 = vmatprep.subr.bf16.mxu0 0
    %1096 = vmatpush1.bf16.msra.mxu0 0
    %1097 = vmatprep.subr.bf16.mxu0 0
    %1098 = vmatpush1.bf16.msra.mxu0 0
    %1099 = vmatprep.subr.bf16.mxu0 0
    %1100 = vmatpush1.bf16.msra.mxu0 0
    %1101 = vmatprep.subr.bf16.mxu0 0
    %1102 = vmatpush1.bf16.msra.mxu0 0
    %1103 = vmatprep.subr.bf16.mxu0 0
    %1104 = vmatpush1.bf16.msra.mxu0 0
    %1105 = vmatprep.subr.bf16.mxu0 0
    %1106 = vmatpush1.bf16.msra.mxu0 0
    %1107 = vmatprep.subr.bf16.mxu0 0
    %1108 = vmatpush1.bf16.msra.mxu0 0
    %1109 = vmatprep.subr.bf16.mxu0 0
    %1110 = vmatpush1.bf16.msra.mxu0 0
    %1111 = vmatprep.subr.bf16.mxu0 0
    %1112 = vmatpush1.bf16.msra.mxu0 0
    %1113 = vmatprep.mubr.bf16.mxu0 0
    %1114 = vmatmul.mubr.bf16.gmra.mrb[0].mxu0 %v1079
    %v1115 = vpop.f32.mrb[0].mxu0
    %v1116 = vadd.f32 0.0, %v1115
    %v1117 = vpop.f32.mrb[0].mxu0
    %v1118 = vpop.f32.mrb[0].mxu0
    %v1119 = vpop.f32.mrb[0].mxu0
    %1120 = vdwg.mxu0
    %v1122 = vsel %vm258, %v895, 0
    %1124 = vmatprep.subr.bf16.mxu0 0
    %1125 = vmatpush1.bf16.msra.mxu0 %v114
    %1126 = vmatprep.subr.bf16.mxu0 0
    %1127 = vmatpush1.bf16.msra.mxu0 0
    %1128 = vmatprep.subr.bf16.mxu0 0
    %1129 = vmatpush1.bf16.msra.mxu0 0
    %1130 = vmatprep.subr.bf16.mxu0 0
    %1131 = vmatpush1.bf16.msra.mxu0 0
    %1132 = vmatprep.subr.bf16.mxu0 0
    %1133 = vmatpush1.bf16.msra.mxu0 0
    %1134 = vmatprep.subr.bf16.mxu0 0
    %1135 = vmatpush1.bf16.msra.mxu0 0
    %1136 = vmatprep.subr.bf16.mxu0 0
    %1137 = vmatpush1.bf16.msra.mxu0 0
    %1138 = vmatprep.subr.bf16.mxu0 0
    %1139 = vmatpush1.bf16.msra.mxu0 0
    %1140 = vmatprep.subr.bf16.mxu0 0
    %1141 = vmatpush1.bf16.msra.mxu0 0
    %1142 = vmatprep.subr.bf16.mxu0 0
    %1143 = vmatpush1.bf16.msra.mxu0 0
    %1144 = vmatprep.subr.bf16.mxu0 0
    %1145 = vmatpush1.bf16.msra.mxu0 0
    %1146 = vmatprep.subr.bf16.mxu0 0
    %1147 = vmatpush1.bf16.msra.mxu0 0
    %1148 = vmatprep.subr.bf16.mxu0 0
    %1149 = vmatpush1.bf16.msra.mxu0 0
    %1150 = vmatprep.subr.bf16.mxu0 0
    %1151 = vmatpush1.bf16.msra.mxu0 0
    %1152 = vmatprep.subr.bf16.mxu0 0
    %1153 = vmatpush1.bf16.msra.mxu0 0
    %1154 = vmatprep.subr.bf16.mxu0 0
    %1155 = vmatpush1.bf16.msra.mxu0 0
    %1156 = vmatprep.mubr.bf16.mxu0 0
    %1157 = vmatmul.mubr.bf16.gmra.mrb[0].mxu0 %v1122
    %v1158 = vpop.f32.mrb[0].mxu0
    %v1159 = vadd.f32 %v1116, %v1158
    %v1160 = vpop.f32.mrb[0].mxu0
    %v1161 = vpop.f32.mrb[0].mxu0
    %v1162 = vpop.f32.mrb[0].mxu0
    %1163 = vdwg.mxu0
    %v1164 = vmul.f32 %v1159, 0.1
    %v1165 = vsub.f32 %v709, %v1164
    %v1166 = vpack.c.bf16 %v1165, %v1165
    %v1168 = vsel %vm87, %v1166, 0
    %1170 = vmatprep.subr.bf16.mxu0 0
    %1171 = vmatpush1.bf16.xpose.msra.mxu0 %v205
    %1172 = vmatprep.subr.bf16.mxu0 0
    %1173 = vmatpush1.bf16.xpose.msra.mxu0 0
    %1174 = vmatprep.subr.bf16.mxu0 0
    %1175 = vmatpush1.bf16.xpose.msra.mxu0 0
    %1176 = vmatprep.subr.bf16.mxu0 0
    %1177 = vmatpush1.bf16.xpose.msra.mxu0 0
    %1178 = vmatprep.subr.bf16.mxu0 0
    %1179 = vmatpush1.bf16.xpose.msra.mxu0 0
    %1180 = vmatprep.subr.bf16.mxu0 0
    %1181 = vmatpush1.bf16.xpose.msra.mxu0 0
    %1182 = vmatprep.subr.bf16.mxu0 0
    %1183 = vmatpush1.bf16.xpose.msra.mxu0 0
    %1184 = vmatprep.subr.bf16.mxu0 0
    %1185 = vmatpush1.bf16.xpose.msra.mxu0 0
    %1186 = vmatprep.subr.bf16.mxu0 0
    %1187 = vmatpush1.bf16.xpose.msra.mxu0 0
    %1188 = vmatprep.subr.bf16.mxu0 0
    %1189 = vmatpush1.bf16.xpose.msra.mxu0 0
    %1190 = vmatprep.subr.bf16.mxu0 0
    %1191 = vmatpush1.bf16.xpose.msra.mxu0 0
    %1192 = vmatprep.subr.bf16.mxu0 0
    %1193 = vmatpush1.bf16.xpose.msra.mxu0 0
    %1194 = vmatprep.subr.bf16.mxu0 0
    %1195 = vmatpush1.bf16.xpose.msra.mxu0 0
    %1196 = vmatprep.subr.bf16.mxu0 0
    %1197 = vmatpush1.bf16.xpose.msra.mxu0 0
    %1198 = vmatprep.subr.bf16.mxu0 0
    %1199 = vmatpush1.bf16.xpose.msra.mxu0 0
    %1200 = vmatprep.subr.bf16.mxu0 0
    %1201 = vmatpush1.bf16.xpose.msra.mxu0 0
    %1202 = vmatprep.mubr.bf16.mxu0 0
    %1203 = vmatmul.mubr.bf16.gmra.mrb[0].mxu0 %v1168
    %v1204 = vpop.f32.mrb[0].mxu0
    %v1205 = vadd.f32 0.0, %v1204
    %v1206 = vpop.f32.mrb[0].mxu0
    %v1207 = vpop.f32.mrb[0].mxu0
    %v1208 = vpop.f32.mrb[0].mxu0
    %1209 = vdwg.mxu0
    %v1210 = vpack.c.bf16 %v1205, %v1205
    %v1212 = vsel %vm258, %v1210, 0
    %1214 = vmatprep.subr.bf16.mxu0 %v255
    %1215 = vmatpush1.bf16.msra.mxu0 %v254
    %1216 = vmatprep.subr.bf16.mxu0 0
    %1217 = vmatpush1.bf16.msra.mxu0 0
    %1218 = vmatprep.subr.bf16.mxu0 0
    %1219 = vmatpush1.bf16.msra.mxu0 0
    %1220 = vmatprep.subr.bf16.mxu0 0
    %1221 = vmatpush1.bf16.msra.mxu0 0
    %1222 = vmatprep.subr.bf16.mxu0 0
    %1223 = vmatpush1.bf16.msra.mxu0 0
    %1224 = vmatprep.subr.bf16.mxu0 0
    %1225 = vmatpush1.bf16.msra.mxu0 0
    %1226 = vmatprep.subr.bf16.mxu0 0
    %1227 = vmatpush1.bf16.msra.mxu0 0
    %1228 = vmatprep.subr.bf16.mxu0 0
    %1229 = vmatpush1.bf16.msra.mxu0 0
    %1230 = vmatprep.subr.bf16.mxu0 0
    %1231 = vmatpush1.bf16.msra.mxu0 0
    %1232 = vmatprep.subr.bf16.mxu0 0
    %1233 = vmatpush1.bf16.msra.mxu0 0
    %1234 = vmatprep.subr.bf16.mxu0 0
    %1235 = vmatpush1.bf16.msra.mxu0 0
    %1236 = vmatprep.subr.bf16.mxu0 0
    %1237 = vmatpush1.bf16.msra.mxu0 0
    %1238 = vmatprep.subr.bf16.mxu0 0
    %1239 = vmatpush1.bf16.msra.mxu0 0
    %1240 = vmatprep.subr.bf16.mxu0 0
    %1241 = vmatpush1.bf16.msra.mxu0 0
    %1242 = vmatprep.subr.bf16.mxu0 0
    %1243 = vmatpush1.bf16.msra.mxu0 0
    %1244 = vmatprep.subr.bf16.mxu0 0
    %1245 = vmatpush1.bf16.msra.mxu0 0
    %1246 = vmatprep.mubr.bf16.mxu0 0
    %1247 = vmatmul.mubr.bf16.gmra.mrb[0].mxu0 %v1212
    %v1248 = vpop.f32.mrb[0].mxu0
    %v1249 = vadd.f32 0.0, %v1248
    %v1250 = vpop.f32.mrb[0].mxu0
    %v1251 = vadd.f32 0.0, %v1250
    %v1252 = vpop.f32.mrb[0].mxu0
    %v1253 = vpop.f32.mrb[0].mxu0
    %1254 = vdwg.mxu0
    %v1257 = vrot.slane %v1249, 1
    %v1258 = vrot.slane %v1251, 1
    %v1261 = vmax.f32 %v1249, %v1257
    %v1262 = vmax.f32 %v1251, %v1258
    %v1263 = vsub.f32 %v1249, %v1261
    %v1264 = vsub.f32 %v1251, %v1262
    %v1265 = vmul.f32 %v1263, 1.442695
    %v1266 = vpow.pop %v1265
    %v1267 = vmul.f32 %v1264, 1.442695
    %v1268 = vpow.pop %v1267
    %v1271 = vrot.slane %v1261, 7
    %v1272 = vrot.slane %v1262, 7
    %v1275 = vsub.f32 %v1249, %v1271
    %v1276 = vsub.f32 %v1251, %v1272
    %v1277 = vmul.f32 %v1275, 1.442695
    %v1278 = vpow.pop %v1277
    %v1279 = vmul.f32 %v1276, 1.442695
    %v1280 = vpow.pop %v1279
    %v1283 = vrot.slane %v1278, 1
    %v1284 = vrot.slane %v1280, 1
    %v1287 = vadd.f32 %v1266, %v1283
    %v1288 = vadd.f32 %v1268, %v1284
    %v1289 = vrcp.pop %v1287
    %v1290 = vmul.f32 1.0, %v1289
    %v1291 = vrcp.pop %v1288
    %v1292 = vmul.f32 1.0, %v1291
    %v1293 = vmul.f32 %v1266, %v1290
    %v1294 = vmul.f32 %v1268, %v1292
    %v1297 = vrot.slane %v1290, 7
    %v1298 = vrot.slane %v1292, 7
    %v1301 = vmul.f32 %v1278, %v1297
    %v1302 = vmul.f32 %v1280, %v1298
    %v1303 = vsel %vm138, %v1293, %v1301
    %v1304 = vsel %vm138, %v1294, %v1302
    %v1305 = vsub.f32 %v1303, %v139
    %v1306 = vsub.f32 %v1304, %v140
    %v1307 = vmul.f32 %v1305, %v369
    %v1308 = vmul.f32 %v1306, %v373
    %v1309 = vpack.c.bf16 %v1307, %v1307
    %v1310 = vpack.c.bf16 %v1308, %v1308
    %1311 = vmatprep.subr.bf16.mxu0 %v255
    %1312 = vmatpush1.bf16.xpose.msra.mxu0 %v254
    %1313 = vmatprep.subr.bf16.mxu0 0
    %1314 = vmatpush1.bf16.xpose.msra.mxu0 0
    %1315 = vmatprep.subr.bf16.mxu0 0
    %1316 = vmatpush1.bf16.xpose.msra.mxu0 0
    %1317 = vmatprep.subr.bf16.mxu0 0
    %1318 = vmatpush1.bf16.xpose.msra.mxu0 0
    %1319 = vmatprep.subr.bf16.mxu0 0
    %1320 = vmatpush1.bf16.xpose.msra.mxu0 0
    %1321 = vmatprep.subr.bf16.mxu0 0
    %1322 = vmatpush1.bf16.xpose.msra.mxu0 0
    %1323 = vmatprep.subr.bf16.mxu0 0
    %1324 = vmatpush1.bf16.xpose.msra.mxu0 0
    %1325 = vmatprep.subr.bf16.mxu0 0
    %1326 = vmatpush1.bf16.xpose.msra.mxu0 0
    %1327 = vmatprep.subr.bf16.mxu0 0
    %1328 = vmatpush1.bf16.xpose.msra.mxu0 0
    %1329 = vmatprep.subr.bf16.mxu0 0
    %1330 = vmatpush1.bf16.xpose.msra.mxu0 0
    %1331 = vmatprep.subr.bf16.mxu0 0
    %1332 = vmatpush1.bf16.xpose.msra.mxu0 0
    %1333 = vmatprep.subr.bf16.mxu0 0
    %1334 = vmatpush1.bf16.xpose.msra.mxu0 0
    %1335 = vmatprep.subr.bf16.mxu0 0
    %1336 = vmatpush1.bf16.xpose.msra.mxu0 0
    %1337 = vmatprep.subr.bf16.mxu0 0
    %1338 = vmatpush1.bf16.xpose.msra.mxu0 0
    %1339 = vmatprep.subr.bf16.mxu0 0
    %1340 = vmatpush1.bf16.xpose.msra.mxu0 0
    %1341 = vmatprep.subr.bf16.mxu0 0
    %1342 = vmatpush1.bf16.xpose.msra.mxu0 0
    %1343 = vmatprep.mubr.bf16.mxu0 %v1310
    %1344 = vmatmul.mubr.bf16.gmra.mrb[0].mxu0 %v1309
    %v1345 = vpop.f32.mrb[0].mxu0
    %v1346 = vadd.f32 0.0, %v1345
    %v1347 = vpop.f32.mrb[0].mxu0
    %v1348 = vpop.f32.mrb[0].mxu0
    %v1349 = vpop.f32.mrb[0].mxu0
    %1350 = vdwg.mxu0
    %v1351 = vpack.c.bf16 %v1346, %v1346
    %1352 = vmatprep.subr.bf16.mxu0 0
    %1353 = vmatpush1.bf16.xpose.msra.mxu0 %v420
    %1354 = vmatprep.subr.bf16.mxu0 0
    %1355 = vmatpush1.bf16.xpose.msra.mxu0 0
    %1356 = vmatprep.subr.bf16.mxu0 0
    %1357 = vmatpush1.bf16.xpose.msra.mxu0 0
    %1358 = vmatprep.subr.bf16.mxu0 0
    %1359 = vmatpush1.bf16.xpose.msra.mxu0 0
    %1360 = vmatprep.subr.bf16.mxu0 0
    %1361 = vmatpush1.bf16.xpose.msra.mxu0 0
    %1362 = vmatprep.subr.bf16.mxu0 0
    %1363 = vmatpush1.bf16.xpose.msra.mxu0 0
    %1364 = vmatprep.subr.bf16.mxu0 0
    %1365 = vmatpush1.bf16.xpose.msra.mxu0 0
    %1366 = vmatprep.subr.bf16.mxu0 0
    %1367 = vmatpush1.bf16.xpose.msra.mxu0 0
    %1368 = vmatprep.subr.bf16.mxu0 0
    %1369 = vmatpush1.bf16.xpose.msra.mxu0 0
    %1370 = vmatprep.subr.bf16.mxu0 0
    %1371 = vmatpush1.bf16.xpose.msra.mxu0 0
    %1372 = vmatprep.subr.bf16.mxu0 0
    %1373 = vmatpush1.bf16.xpose.msra.mxu0 0
    %1374 = vmatprep.subr.bf16.mxu0 0
    %1375 = vmatpush1.bf16.xpose.msra.mxu0 0
    %1376 = vmatprep.subr.bf16.mxu0 0
    %1377 = vmatpush1.bf16.xpose.msra.mxu0 0
    %1378 = vmatprep.subr.bf16.mxu0 0
    %1379 = vmatpush1.bf16.xpose.msra.mxu0 0
    %1380 = vmatprep.subr.bf16.mxu0 0
    %1381 = vmatpush1.bf16.xpose.msra.mxu0 0
    %1382 = vmatprep.subr.bf16.mxu0 0
    %1383 = vmatpush1.bf16.xpose.msra.mxu0 0
    %1384 = vmatprep.mubr.bf16.mxu0 0
    %1385 = vmatmul.mubr.bf16.gmra.mrb[0].mxu0 %v1168
    %v1386 = vpop.f32.mrb[0].mxu0
    %v1387 = vadd.f32 0.0, %v1386
    %v1388 = vpop.f32.mrb[0].mxu0
    %v1389 = vpop.f32.mrb[0].mxu0
    %v1390 = vpop.f32.mrb[0].mxu0
    %1391 = vdwg.mxu0
    %v1392 = vpack.c.bf16 %v1387, %v1387
    %v1394 = vsel %vm258, %v1392, 0
    %1396 = vmatprep.subr.bf16.mxu0 %v255
    %1397 = vmatpush1.bf16.msra.mxu0 %v254
    %1398 = vmatprep.subr.bf16.mxu0 0
    %1399 = vmatpush1.bf16.msra.mxu0 0
    %1400 = vmatprep.subr.bf16.mxu0 0
    %1401 = vmatpush1.bf16.msra.mxu0 0
    %1402 = vmatprep.subr.bf16.mxu0 0
    %1403 = vmatpush1.bf16.msra.mxu0 0
    %1404 = vmatprep.subr.bf16.mxu0 0
    %1405 = vmatpush1.bf16.msra.mxu0 0
    %1406 = vmatprep.subr.bf16.mxu0 0
    %1407 = vmatpush1.bf16.msra.mxu0 0
    %1408 = vmatprep.subr.bf16.mxu0 0
    %1409 = vmatpush1.bf16.msra.mxu0 0
    %1410 = vmatprep.subr.bf16.mxu0 0
    %1411 = vmatpush1.bf16.msra.mxu0 0
    %1412 = vmatprep.subr.bf16.mxu0 0
    %1413 = vmatpush1.bf16.msra.mxu0 0
    %1414 = vmatprep.subr.bf16.mxu0 0
    %1415 = vmatpush1.bf16.msra.mxu0 0
    %1416 = vmatprep.subr.bf16.mxu0 0
    %1417 = vmatpush1.bf16.msra.mxu0 0
    %1418 = vmatprep.subr.bf16.mxu0 0
    %1419 = vmatpush1.bf16.msra.mxu0 0
    %1420 = vmatprep.subr.bf16.mxu0 0
    %1421 = vmatpush1.bf16.msra.mxu0 0
    %1422 = vmatprep.subr.bf16.mxu0 0
    %1423 = vmatpush1.bf16.msra.mxu0 0
    %1424 = vmatprep.subr.bf16.mxu0 0
    %1425 = vmatpush1.bf16.msra.mxu0 0
    %1426 = vmatprep.subr.bf16.mxu0 0
    %1427 = vmatpush1.bf16.msra.mxu0 0
    %1428 = vmatprep.mubr.bf16.mxu0 0
    %1429 = vmatmul.mubr.bf16.gmra.mrb[0].mxu0 %v1394
    %v1430 = vpop.f32.mrb[0].mxu0
    %v1431 = vadd.f32 0.0, %v1430
    %v1432 = vpop.f32.mrb[0].mxu0
    %v1433 = vadd.f32 0.0, %v1432
    %v1434 = vpop.f32.mrb[0].mxu0
    %v1435 = vpop.f32.mrb[0].mxu0
    %1436 = vdwg.mxu0
    %v1439 = vrot.slane %v1431, 1
    %v1440 = vrot.slane %v1433, 1
    %v1443 = vmax.f32 %v1431, %v1439
    %v1444 = vmax.f32 %v1433, %v1440
    %v1445 = vsub.f32 %v1431, %v1443
    %v1446 = vsub.f32 %v1433, %v1444
    %v1447 = vmul.f32 %v1445, 1.442695
    %v1448 = vpow.pop %v1447
    %v1449 = vmul.f32 %v1446, 1.442695
    %v1450 = vpow.pop %v1449
    %v1453 = vrot.slane %v1443, 7
    %v1454 = vrot.slane %v1444, 7
    %v1457 = vsub.f32 %v1431, %v1453
    %v1458 = vsub.f32 %v1433, %v1454
    %v1459 = vmul.f32 %v1457, 1.442695
    %v1460 = vpow.pop %v1459
    %v1461 = vmul.f32 %v1458, 1.442695
    %v1462 = vpow.pop %v1461
    %v1465 = vrot.slane %v1460, 1
    %v1466 = vrot.slane %v1462, 1
    %v1469 = vadd.f32 %v1448, %v1465
    %v1470 = vadd.f32 %v1450, %v1466
    %v1471 = vrcp.pop %v1469
    %v1472 = vmul.f32 1.0, %v1471
    %v1473 = vrcp.pop %v1470
    %v1474 = vmul.f32 1.0, %v1473
    %v1475 = vmul.f32 %v1448, %v1472
    %v1476 = vmul.f32 %v1450, %v1474
    %v1479 = vrot.slane %v1472, 7
    %v1480 = vrot.slane %v1474, 7
    %v1483 = vmul.f32 %v1460, %v1479
    %v1484 = vmul.f32 %v1462, %v1480
    %v1485 = vsel %vm138, %v1475, %v1483
    %v1486 = vsel %vm138, %v1476, %v1484
    %v1487 = vsub.f32 %v1485, %v197
    %v1488 = vsub.f32 %v1486, %v198
    %v1489 = vmul.f32 %v1487, %v572
    %v1490 = vmul.f32 %v1488, %v576
    %v1491 = vpack.c.bf16 %v1489, %v1489
    %v1492 = vpack.c.bf16 %v1490, %v1490
    %1493 = vmatprep.subr.bf16.mxu0 %v255
    %1494 = vmatpush1.bf16.xpose.msra.mxu0 %v254
    %1495 = vmatprep.subr.bf16.mxu0 0
    %1496 = vmatpush1.bf16.xpose.msra.mxu0 0
    %1497 = vmatprep.subr.bf16.mxu0 0
    %1498 = vmatpush1.bf16.xpose.msra.mxu0 0
    %1499 = vmatprep.subr.bf16.mxu0 0
    %1500 = vmatpush1.bf16.xpose.msra.mxu0 0
    %1501 = vmatprep.subr.bf16.mxu0 0
    %1502 = vmatpush1.bf16.xpose.msra.mxu0 0
    %1503 = vmatprep.subr.bf16.mxu0 0
    %1504 = vmatpush1.bf16.xpose.msra.mxu0 0
    %1505 = vmatprep.subr.bf16.mxu0 0
    %1506 = vmatpush1.bf16.xpose.msra.mxu0 0
    %1507 = vmatprep.subr.bf16.mxu0 0
    %1508 = vmatpush1.bf16.xpose.msra.mxu0 0
    %1509 = vmatprep.subr.bf16.mxu0 0
    %1510 = vmatpush1.bf16.xpose.msra.mxu0 0
    %1511 = vmatprep.subr.bf16.mxu0 0
    %1512 = vmatpush1.bf16.xpose.msra.mxu0 0
    %1513 = vmatprep.subr.bf16.mxu0 0
    %1514 = vmatpush1.bf16.xpose.msra.mxu0 0
    %1515 = vmatprep.subr.bf16.mxu0 0
    %1516 = vmatpush1.bf16.xpose.msra.mxu0 0
    %1517 = vmatprep.subr.bf16.mxu0 0
    %1518 = vmatpush1.bf16.xpose.msra.mxu0 0
    %1519 = vmatprep.subr.bf16.mxu0 0
    %1520 = vmatpush1.bf16.xpose.msra.mxu0 0
    %1521 = vmatprep.subr.bf16.mxu0 0
    %1522 = vmatpush1.bf16.xpose.msra.mxu0 0
    %1523 = vmatprep.subr.bf16.mxu0 0
    %1524 = vmatpush1.bf16.xpose.msra.mxu0 0
    %1525 = vmatprep.mubr.bf16.mxu0 %v1492
    %1526 = vmatmul.mubr.bf16.gmra.mrb[0].mxu0 %v1491
    %v1527 = vpop.f32.mrb[0].mxu0
    %v1528 = vadd.f32 0.0, %v1527
    %v1529 = vpop.f32.mrb[0].mxu0
    %v1530 = vpop.f32.mrb[0].mxu0
    %v1531 = vpop.f32.mrb[0].mxu0
    %1532 = vdwg.mxu0
    %v1533 = vpack.c.bf16 %v1528, %v1528
    %v1535 = vsel %vm258, %v1533, 0
    %1537 = vmatprep.subr.bf16.mxu0 0
    %1538 = vmatpush1.bf16.msra.mxu0 %v176
    %1539 = vmatprep.subr.bf16.mxu0 0
    %1540 = vmatpush1.bf16.msra.mxu0 0
    %1541 = vmatprep.subr.bf16.mxu0 0
    %1542 = vmatpush1.bf16.msra.mxu0 0
    %1543 = vmatprep.subr.bf16.mxu0 0
    %1544 = vmatpush1.bf16.msra.mxu0 0
    %1545 = vmatprep.subr.bf16.mxu0 0
    %1546 = vmatpush1.bf16.msra.mxu0 0
    %1547 = vmatprep.subr.bf16.mxu0 0
    %1548 = vmatpush1.bf16.msra.mxu0 0
    %1549 = vmatprep.subr.bf16.mxu0 0
    %1550 = vmatpush1.bf16.msra.mxu0 0
    %1551 = vmatprep.subr.bf16.mxu0 0
    %1552 = vmatpush1.bf16.msra.mxu0 0
    %1553 = vmatprep.subr.bf16.mxu0 0
    %1554 = vmatpush1.bf16.msra.mxu0 0
    %1555 = vmatprep.subr.bf16.mxu0 0
    %1556 = vmatpush1.bf16.msra.mxu0 0
    %1557 = vmatprep.subr.bf16.mxu0 0
    %1558 = vmatpush1.bf16.msra.mxu0 0
    %1559 = vmatprep.subr.bf16.mxu0 0
    %1560 = vmatpush1.bf16.msra.mxu0 0
    %1561 = vmatprep.subr.bf16.mxu0 0
    %1562 = vmatpush1.bf16.msra.mxu0 0
    %1563 = vmatprep.subr.bf16.mxu0 0
    %1564 = vmatpush1.bf16.msra.mxu0 0
    %1565 = vmatprep.subr.bf16.mxu0 0
    %1566 = vmatpush1.bf16.msra.mxu0 0
    %1567 = vmatprep.subr.bf16.mxu0 0
    %1568 = vmatpush1.bf16.msra.mxu0 0
    %1569 = vmatprep.mubr.bf16.mxu0 0
    %1570 = vmatmul.mubr.bf16.gmra.mrb[0].mxu0 %v1535
    %v1571 = vpop.f32.mrb[0].mxu0
    %v1572 = vadd.f32 0.0, %v1571
    %v1573 = vpop.f32.mrb[0].mxu0
    %v1574 = vpop.f32.mrb[0].mxu0
    %v1575 = vpop.f32.mrb[0].mxu0
    %1576 = vdwg.mxu0
    %v1578 = vsel %vm258, %v1351, 0
    %1580 = vmatprep.subr.bf16.mxu0 0
    %1581 = vmatpush1.bf16.msra.mxu0 %v114
    %1582 = vmatprep.subr.bf16.mxu0 0
    %1583 = vmatpush1.bf16.msra.mxu0 0
    %1584 = vmatprep.subr.bf16.mxu0 0
    %1585 = vmatpush1.bf16.msra.mxu0 0
    %1586 = vmatprep.subr.bf16.mxu0 0
    %1587 = vmatpush1.bf16.msra.mxu0 0
    %1588 = vmatprep.subr.bf16.mxu0 0
    %1589 = vmatpush1.bf16.msra.mxu0 0
    %1590 = vmatprep.subr.bf16.mxu0 0
    %1591 = vmatpush1.bf16.msra.mxu0 0
    %1592 = vmatprep.subr.bf16.mxu0 0
    %1593 = vmatpush1.bf16.msra.mxu0 0
    %1594 = vmatprep.subr.bf16.mxu0 0
    %1595 = vmatpush1.bf16.msra.mxu0 0
    %1596 = vmatprep.subr.bf16.mxu0 0
    %1597 = vmatpush1.bf16.msra.mxu0 0
    %1598 = vmatprep.subr.bf16.mxu0 0
    %1599 = vmatpush1.bf16.msra.mxu0 0
    %1600 = vmatprep.subr.bf16.mxu0 0
    %1601 = vmatpush1.bf16.msra.mxu0 0
    %1602 = vmatprep.subr.bf16.mxu0 0
    %1603 = vmatpush1.bf16.msra.mxu0 0
    %1604 = vmatprep.subr.bf16.mxu0 0
    %1605 = vmatpush1.bf16.msra.mxu0 0
    %1606 = vmatprep.subr.bf16.mxu0 0
    %1607 = vmatpush1.bf16.msra.mxu0 0
    %1608 = vmatprep.subr.bf16.mxu0 0
    %1609 = vmatpush1.bf16.msra.mxu0 0
    %1610 = vmatprep.subr.bf16.mxu0 0
    %1611 = vmatpush1.bf16.msra.mxu0 0
    %1612 = vmatprep.mubr.bf16.mxu0 0
    %1613 = vmatmul.mubr.bf16.gmra.mrb[0].mxu0 %v1578
    %v1614 = vpop.f32.mrb[0].mxu0
    %v1615 = vadd.f32 %v1572, %v1614
    %v1616 = vpop.f32.mrb[0].mxu0
    %v1617 = vpop.f32.mrb[0].mxu0
    %v1618 = vpop.f32.mrb[0].mxu0
    %1619 = vdwg.mxu0
    %v1620 = vmul.f32 %v1615, 0.1
    %v1621 = vsub.f32 %v1165, %v1620
    %vm1622 = vcmask 254976
    %1623 = vst.msk [vmem:[#allocation7] sm:$0x3] %vm1622, %v1621
    // Predicated region
    $region30: #{tpu_custom_call.1} parent=1 // pred_check
      _
    $region31: #{tpu_custom_call.1} parent=1 // pred_check_branch
      %1625 = sbr.rel (0) target = $region33
    $region32: #{tpu_custom_call.1} parent=1 // pred_region
      %s1627 = ssub.s32 32, 32
      %1628 = vsyncadd [#allocation4], %s1627
      %s1630 = sshll.u32 [#allocation7], 4
      %s1631 = int_to_ptr.vmem [resolvable:$true] %s1630
      %1633 = dma.vmem_to_hbm [thread:$0]  %s1631, 32, %s5, [#allocation4]
    $region33: #{tpu_custom_call.1} parent=1 // pred_fallthru
      _
    // Predicated region
    $region34: #{tpu_custom_call.1} parent=1 // pred_check
      _
    $region35: #{tpu_custom_call.1} parent=1 // pred_check_branch
      %1635 = sbr.rel (0) target = $region37
    $region36: #{tpu_custom_call.1} parent=1 // pred_region
      %1636 = dma.done [#allocation4], 32
    $region37: #{tpu_custom_call.1} parent=1 // pred_fallthru
      _
    %1637 = vsyncpa [#allocation3], 1
    %1638 = vsyncpa [#allocation6], 1
    %1639 = vsyncpa [#allocation4], 1

</llo_original>
